<compile_context>
chip_gen: v6e
topology: v6e:2x2x1
jax: 0.10.0
libtpu: 0.0.40
codegen_flags: <defaults>
</compile_context>

<pallas_src>
import functools

import jax
import jax.numpy as jnp
from jax import lax
from jax.experimental import pallas as pl
from jax.experimental.pallas import tpu as pltpu


# ---------------------------------------------------------------------------
# feature map
# ---------------------------------------------------------------------------
def _elu_plus_one(x):
    # phi(x) = elu(x) + 1 = x + 1 if x > 0 else exp(x).
    # exp() overflow on the x > 0 branch is masked by the where -> no NaN/Inf.
    return jnp.where(x > 0.0, x + 1.0, jnp.exp(x))


# ---------------------------------------------------------------------------
# kernels
# ---------------------------------------------------------------------------
def _kv_reduce_kernel(k_ref, v_ref, kv_ref, ksum_ref, *,
                      temp, compute_dtype, seq_len, s_tile, mask_tail):
    """Pass 1: accumulate kv = phi(k)^T @ v and ksum = phi(k)^T @ 1 over S."""
    # k_ref: [tS, HB, D], v_ref: [tS, HB, M]
    # kv_ref: [HB, D, M] f32, ksum_ref: [HB, D, 1] f32 (resident across S axis)
    s = pl.program_id(2)

    @pl.when(s == 0)
    def _init():
        kv_ref[...] = jnp.zeros_like(kv_ref)
        ksum_ref[...] = jnp.zeros_like(ksum_ref)

    # Feature map in f32 (v5e-safe); matmul operands in compute_dtype with
    # f32 accumulation on the MXU.
    kf = _elu_plus_one(k_ref[...].astype(jnp.float32) * temp)   # [tS, HB, D]
    kf_op = kf.astype(compute_dtype)
    v_op = v_ref[...].astype(compute_dtype)                     # [tS, HB, M]

    if mask_tail:
        # cdiv grid over S: zero the padded rows of the last block so the
        # unspecified padded HBM reads cannot pollute the accumulators.
        row = lax.broadcasted_iota(jnp.int32, (s_tile, 1, 1), 0)
        valid = row < (seq_len - s * s_tile)
        kf_op = jnp.where(valid, kf_op, jnp.zeros_like(kf_op))
        v_op = jnp.where(valid, v_op, jnp.zeros_like(v_op))

    # kv[h] += phi(k)[:, h, :]^T @ v[:, h, :]   (contract S, batch H) -> [HB, D, M]
    kv_ref[...] += lax.dot_general(
        kf_op, v_op,
        dimension_numbers=(((0,), (0,)), ((1,), (1,))),
        preferred_element_type=jnp.float32)

    # ksum[h] += phi(k)[:, h, :]^T @ ones       (same structure, M -> 1) -> [HB, D, 1]
    ones_col = jnp.ones((kf_op.shape[0], kf_op.shape[1], 1), dtype=compute_dtype)
    ksum_ref[...] += lax.dot_general(
        kf_op, ones_col,
        dimension_numbers=(((0,), (0,)), ((1,), (1,))),
        preferred_element_type=jnp.float32)


def _output_kernel(q_ref, kv_ref, ksum_ref, o_ref, *, temp, eps, compute_dtype):
    """Pass 2: o = (phi(q) @ kv) * 1 / (phi(q) @ ksum + eps)."""
    # q_ref: [tL, HB, D], kv_ref: [HB, D, M] f32, ksum_ref: [HB, D, 1] f32
    # o_ref: [HB, tL, M]
    qf = _elu_plus_one(q_ref[...].astype(jnp.float32) * temp)   # [tL, HB, D]
    qf_op = qf.astype(compute_dtype)
    kv_op = kv_ref[...].astype(compute_dtype)
    ksum_op = ksum_ref[...].astype(compute_dtype)

    # numerator[h] = phi(q)[:, h, :] @ kv[h]    (contract D, batch H) -> [HB, tL, M]
    num = lax.dot_general(
        qf_op, kv_op,
        dimension_numbers=(((2,), (1,)), ((1,), (0,))),
        preferred_element_type=jnp.float32)

    # den[h] = phi(q)[:, h, :] @ ksum[h]        (same structure, M -> 1) -> [HB, tL, 1]
    den = lax.dot_general(
        qf_op, ksum_op,
        dimension_numbers=(((2,), (1,)), ((1,), (0,))),
        preferred_element_type=jnp.float32) + eps

    z = pl.reciprocal(den, approx=True)         # EUP
    z = z * (2.0 - den * z)                     # one Newton refinement
    o_ref[...] = (num * z).astype(o_ref.dtype)


# ---------------------------------------------------------------------------
# VMEM-budget-aware tiling
# ---------------------------------------------------------------------------
def _round_up(x, m):
    return ((x + m - 1) // m) * m


def _vmem_budget_bytes():
    """(per-program usage budget, vmem_limit_bytes) from the local chip's VMEM."""
    try:
        cap = int(pltpu.get_tpu_info().vmem_capacity_bytes)
        if cap <= 0:
            raise ValueError("bad vmem capacity")
    except Exception:                       # conservative fallback: v7x per-TC VMEM
        cap = 64 * 1024 * 1024
    return int(0.80 * cap), int(0.90 * cap)


def _padded_bytes(shape, itemsize):
    """VMEM footprint: minor dim padded to 128 lanes, second-minor to the
    dtype's sublane tile (8 * 32-bit words)."""
    s = list(shape)
    s[-1] = _round_up(s[-1], 128)
    if len(s) >= 2:
        s[-2] = _round_up(s[-2], max(8, (8 * 4) // itemsize))
    n = itemsize
    for d in s:
        n *= d
    return n


def _pick_head_block(H, itemsize):
    """Head-group size: a sublane-aligned divisor of H if one exists, else H."""
    sub = max(8, (8 * 4) // itemsize)
    if H > sub and H % sub == 0:
        return sub
    return H


def _pick_s_tile(S, HB, D, M, in_item, cd_item, budget):
    """Largest S tile whose pass-1 per-program VMEM estimate fits the budget."""
    per_row = (
        2 * _padded_bytes((1, HB, D), in_item)    # k block (double-buffered)
        + 2 * _padded_bytes((1, HB, M), in_item)  # v block (double-buffered)
        + _padded_bytes((1, HB, D), 4)            # k/kf f32 temporary
        + _padded_bytes((1, HB, D), cd_item)      # kf_op
        + _padded_bytes((1, HB, M), cd_item)      # v_op
        + _padded_bytes((1, HB, 1), cd_item)      # ones column
        + _padded_bytes((1, HB, D), 4)            # tail-mask / misc temporaries
        + _padded_bytes((1, 1, 1), 4))            # iota
    fixed = (2 * _padded_bytes((HB, D, M), 4)     # kv output block
             + 2 * _padded_bytes((HB, D, 1), 4)   # ksum output block
             + (2 << 20))                         # compiler slack
    tS = (budget - fixed) // max(per_row, 1)
    if tS >= S:
        return S
    return max(8, (tS // 8) * 8)


def _pick_l_tile(L, HB, D, M, in_item, out_item, cd_item, budget):
    """Largest L tile whose pass-2 per-program VMEM estimate fits the budget."""
    lanes_m = _round_up(M, 128)
    per_row = (
        2 * _padded_bytes((1, HB, D), in_item)    # q block (double-buffered)
        + 2 * HB * lanes_m * out_item             # out block (double-buffered)
        + _padded_bytes((1, HB, D), 4)            # q/qf f32 temporary
        + _padded_bytes((1, HB, D), cd_item)      # qf_op
        + HB * lanes_m * 4                        # num (f32)
        + 2 * HB * 128 * 4)                       # den / z (f32, lane-padded)
    fixed = (2 * _padded_bytes((HB, D, M), 4)     # kv input block
             + 2 * _padded_bytes((HB, D, 1), 4)   # ksum input block
             + _padded_bytes((HB, D, M), cd_item)  # kv_op cast
             + _padded_bytes((HB, D, 1), cd_item)  # ksum_op cast
             + (2 << 20))
    tL = (budget - fixed) // max(per_row, 1)
    if tL >= L:
        return L
    return max(8, (tL // 8) * 8)


def _sanitize_l_tile(tL, L):
    """L tile must be a multiple of 8 or the full L (out-block constraint)."""
    tL = max(1, min(int(tL), L))
    if tL >= L:
        return L
    tL = (tL // 8) * 8
    return tL if tL >= 8 else L


# ---------------------------------------------------------------------------
# wrapper
# ---------------------------------------------------------------------------
def linear_attention(queries, keys, values, *, softmax_temp=None, eps=1e-6,
                     mxu_dtype=None, s_block=None, l_block=None):
    """queries [N,L,H,D], keys [N,S,H,D], values [N,S,H,M] -> [N,H,L,M]."""
    N, L, H, D = queries.shape
    _, S, _, M = values.shape
    temp = float(softmax_temp) if softmax_temp is not None else float(D) ** (-0.25)

    out_dtype = jnp.result_type(queries.dtype, keys.dtype, values.dtype)
    if mxu_dtype is not None:
        compute_dtype = jnp.dtype(mxu_dtype)
    elif all(x.dtype == jnp.bfloat16 for x in (queries, keys, values)):
        compute_dtype = jnp.bfloat16
    else:
        compute_dtype = jnp.float32

    in_item = max(queries.dtype.itemsize, keys.dtype.itemsize,
                  values.dtype.itemsize)
    out_item = jnp.dtype(out_dtype).itemsize
    cd_item = jnp.dtype(compute_dtype).itemsize

    budget, vmem_limit = _vmem_budget_bytes()
    HB = _pick_head_block(H, in_item)
    n_hb = H // HB
    sq = pl.Squeezed()

    # ------------------- pass 1: kv / ksum reduction over S -------------------
    tS = int(s_block) if s_block is not None else _pick_s_tile(
        S, HB, D, M, in_item, cd_item, budget)
    tS = max(1, min(tS, S))
    n_s = pl.cdiv(S, tS)
    mask_tail = (S % tS) != 0

    kernel1 = functools.partial(
        _kv_reduce_kernel, temp=temp, compute_dtype=compute_dtype,
        seq_len=S, s_tile=tS, mask_tail=mask_tail)

    cost1 = pl.CostEstimate(
        flops=int(2 * N * H * S * D * (M + 1)),
        transcendentals=int(N * S * H * D),
        bytes_accessed=int(keys.size * keys.dtype.itemsize
                           + values.size * values.dtype.itemsize
                           + N * H * D * (M + 1) * 4))

    kv, ksum = pl.pallas_call(
        kernel1,
        out_shape=(jax.ShapeDtypeStruct((N, H, D, M), jnp.float32),
                   jax.ShapeDtypeStruct((N, H, D, 1), jnp.float32)),
        grid_spec=pltpu.PrefetchScalarGridSpec(
            num_scalar_prefetch=0,
            grid=(N, n_hb, n_s),
            in_specs=[
                pl.BlockSpec((sq, tS, HB, D), lambda n, h, s: (n, s, h, 0)),
                pl.BlockSpec((sq, tS, HB, M), lambda n, h, s: (n, s, h, 0)),
            ],
            out_specs=[
                pl.BlockSpec((sq, HB, D, M), lambda n, h, s: (n, h, 0, 0)),
                pl.BlockSpec((sq, HB, D, 1), lambda n, h, s: (n, h, 0, 0)),
            ],
        ),
        compiler_params=pltpu.CompilerParams(
            dimension_semantics=("parallel", "parallel", "arbitrary"),
            vmem_limit_bytes=vmem_limit),
        cost_estimate=cost1,
    )(keys, values)

    # ------------------------ pass 2: output over L tiles ----------------------
    if l_block is not None:
        tL = _sanitize_l_tile(l_block, L)
    else:
        tL = _sanitize_l_tile(
            _pick_l_tile(L, HB, D, M, in_item, out_item, cd_item, budget), L)
    n_l = pl.cdiv(L, tL)

    kernel2 = functools.partial(
        _output_kernel, temp=temp, eps=eps, compute_dtype=compute_dtype)

    cost2 = pl.CostEstimate(
        flops=int(2 * N * H * L * D * (M + 1) + 4 * N * H * L * M),
        transcendentals=int(N * L * H * D + N * H * L),
        bytes_accessed=int(queries.size * queries.dtype.itemsize
                           + N * H * D * (M + 1) * 4
                           + N * H * L * M * out_item))

    out = pl.pallas_call(
        kernel2,
        out_shape=jax.ShapeDtypeStruct((N, H, L, M), out_dtype),
        grid_spec=pltpu.PrefetchScalarGridSpec(
            num_scalar_prefetch=0,
            grid=(N, n_hb, n_l),
            in_specs=[
                pl.BlockSpec((sq, tL, HB, D), lambda n, h, l: (n, l, h, 0)),
                pl.BlockSpec((sq, HB, D, M), lambda n, h, l: (n, h, 0, 0)),
                pl.BlockSpec((sq, HB, D, 1), lambda n, h, l: (n, h, 0, 0)),
            ],
            out_specs=pl.BlockSpec((sq, HB, tL, M), lambda n, h, l: (n, h, l, 0)),
        ),
        compiler_params=pltpu.CompilerParams(
            dimension_semantics=("parallel", "parallel", "parallel"),
            vmem_limit_bytes=vmem_limit),
        cost_estimate=cost2,
    )(queries, kv, ksum)
    return out  # [N, H, L, M]


# ---------------------------------------------------------------------------
# reference + self-test
# ---------------------------------------------------------------------------
def _reference(queries, keys, values, *, softmax_temp=None, eps=1e-6):
    D = queries.shape[-1]
    temp = softmax_temp if softmax_temp is not None else float(D) ** (-0.25)
    q = queries * temp
    k = keys * temp
    phi = lambda x: jnp.where(x > 0.0, x + 1.0, jnp.exp(x))
    qf, kf = phi(q), phi(k)
    kv = jnp.einsum('nshd,nshm->nhmd', kf, values)
    z = 1.0 / (jnp.einsum('nlhd,nhd->nlh', qf, kf.sum(axis=1)) + eps)
    v = jnp.einsum('nlhd,nhmd,nlh->nlhm', qf, kv, z)
    return jnp.transpose(v, (0, 2, 1, 3))  # [N, H, L, M]


if __name__ == "__main__":
    root = jax.random.PRNGKey(0)
    kq, kk, kv_key = jax.random.split(root, 3)

    # Case 1: tiny shapes (in_channels = D = 16), single S / L tile.
    N, L, S, H, D, M = 2, 8, 8, 2, 16, 16
    q = jax.random.normal(kq, (N, L, H, D), dtype=jnp.float32)
    k = jax.random.normal(kk, (N, S, H, D), dtype=jnp.float32)
    v = jax.random.normal(kv_key, (N, S, H, M), dtype=jnp.float32)
    out = jax.block_until_ready(linear_attention(q, k, v))
    ref = _reference(q, k, v)
    assert out.shape == (N, H, L, M)
    assert jnp.allclose(out, ref, atol=1e-4, rtol=1e-4), "case 1 mismatch vs reference"

    # Case 2: non-divisible S and L with forced small tiles — exercises the
    # multi-step S reduction, the tail mask, and L tiling.
    L2, S2 = 12, 20
    q2 = jax.random.normal(kq, (N, L2, H, D), dtype=jnp.float32)
    k2 = jax.random.normal(kk, (N, S2, H, D), dtype=jnp.float32)
    v2 = jax.random.normal(kv_key, (N, S2, H, M), dtype=jnp.float32)
    out2 = jax.block_until_ready(
        linear_attention(q2, k2, v2, s_block=8, l_block=8))
    ref2 = _reference(q2, k2, v2)
    assert out2.shape == (N, H, L2, M)
    assert jnp.allclose(out2, ref2, atol=1e-4, rtol=1e-4), "case 2 mismatch vs reference"

    print("KERNEL_OK")
</pallas_src>

<mosaic_0001>
module attributes {stable_mosaic.version = 11 : i64} {
  func.func @_kv_reduce_kernel(%arg0: i32, %arg1: i32, %arg2: i32, %arg3: memref<1x8x2x16xf32, #tpu.memory_space<vmem>>, %arg4: memref<1x8x2x16xf32, #tpu.memory_space<vmem>>, %arg5: memref<1x2x16x16xf32, #tpu.memory_space<vmem>>, %arg6: memref<1x2x16x1xf32, #tpu.memory_space<vmem>>) attributes {dimension_semantics = [#tpu.dimension_semantics<parallel>, #tpu.dimension_semantics<parallel>, #tpu.dimension_semantics<arbitrary>], iteration_bounds = array<i64: 2, 1, 1>, scalar_prefetch = 0 : i64, scratch_operands = 0 : i64, tpu.core_type = #tpu.core_type<tc>, window_params = [{transform_indices = @transform_0, window_bounds = array<i64: 1, 8, 2, 16>}, {transform_indices = @transform_1, window_bounds = array<i64: 1, 8, 2, 16>}, {transform_indices = @transform_2, window_bounds = array<i64: 1, 2, 16, 16>}, {transform_indices = @transform_3, window_bounds = array<i64: 1, 2, 16, 1>}]} {
    %c0_i32 = arith.constant 0 : i32
    %0 = arith.cmpi eq, %arg2, %c0_i32 : i32
    %1 = arith.extui %0 : i1 to i32
    %c0_i32_0 = arith.constant 0 : i32
    %2 = arith.cmpi ne, %1, %c0_i32_0 : i32
    scf.if %2 {
      %cst_29 = arith.constant 0.000000e+00 : f32
      %30 = vector.broadcast %cst_29 : f32 to vector<2x16x16xf32>
      %c0_30 = arith.constant 0 : index
      %c0_31 = arith.constant 0 : index
      %c0_32 = arith.constant 0 : index
      %c0_33 = arith.constant 0 : index
      %31 = vector.load %arg5[%c0_30, %c0_31, %c0_32, %c0_33] : memref<1x2x16x16xf32, #tpu.memory_space<vmem>>, vector<1x2x16x16xf32>
      %32 = vector.shape_cast %31 : vector<1x2x16x16xf32> to vector<2x16x16xf32>
      %33 = vector.shape_cast %30 : vector<2x16x16xf32> to vector<1x2x16x16xf32>
      tpu.vector_store %arg5[%c0_30, %c0_31, %c0_32, %c0_33], %33 {strides = array<i32>} : memref<1x2x16x16xf32, #tpu.memory_space<vmem>>, vector<1x2x16x16xf32>,
      %cst_34 = arith.constant 0.000000e+00 : f32
      %34 = vector.broadcast %cst_34 : f32 to vector<2x16x1xf32>
      %c0_35 = arith.constant 0 : index
      %c0_36 = arith.constant 0 : index
      %c0_37 = arith.constant 0 : index
      %c0_38 = arith.constant 0 : index
      %35 = vector.load %arg6[%c0_35, %c0_36, %c0_37, %c0_38] : memref<1x2x16x1xf32, #tpu.memory_space<vmem>>, vector<1x2x16x1xf32>
      %36 = vector.shape_cast %35 : vector<1x2x16x1xf32> to vector<2x16x1xf32>
      %37 = vector.shape_cast %34 : vector<2x16x1xf32> to vector<1x2x16x1xf32>
      tpu.vector_store %arg6[%c0_35, %c0_36, %c0_37, %c0_38], %37 {strides = array<i32>} : memref<1x2x16x1xf32, #tpu.memory_space<vmem>>, vector<1x2x16x1xf32>,
    } else {
    }
    %c0 = arith.constant 0 : index
    %c0_1 = arith.constant 0 : index
    %c0_2 = arith.constant 0 : index
    %c0_3 = arith.constant 0 : index
    %3 = vector.load %arg3[%c0, %c0_1, %c0_2, %c0_3] : memref<1x8x2x16xf32, #tpu.memory_space<vmem>>, vector<1x8x2x16xf32>
    %4 = vector.shape_cast %3 : vector<1x8x2x16xf32> to vector<8x2x16xf32>
    %cst = arith.constant 5.000000e-01 : f32
    %5 = vector.broadcast %cst : f32 to vector<8x2x16xf32>
    %6 = arith.mulf %4, %5 : vector<8x2x16xf32>
    %cst_4 = arith.constant 0.000000e+00 : f32
    %7 = vector.broadcast %cst_4 : f32 to vector<8x2x16xf32>
    %8 = arith.cmpf ogt, %6, %7 : vector<8x2x16xf32>
    %cst_5 = arith.constant 1.000000e+00 : f32
    %9 = vector.broadcast %cst_5 : f32 to vector<8x2x16xf32>
    %10 = arith.addf %6, %9 : vector<8x2x16xf32>
    %11 = math.exp %6 : vector<8x2x16xf32>
    %12 = arith.select %8, %10, %11 : vector<8x2x16xi1>, vector<8x2x16xf32>
    %c0_6 = arith.constant 0 : index
    %c0_7 = arith.constant 0 : index
    %c0_8 = arith.constant 0 : index
    %c0_9 = arith.constant 0 : index
    %13 = vector.load %arg4[%c0_6, %c0_7, %c0_8, %c0_9] : memref<1x8x2x16xf32, #tpu.memory_space<vmem>>, vector<1x8x2x16xf32>
    %14 = vector.shape_cast %13 : vector<1x8x2x16xf32> to vector<8x2x16xf32>
    %c0_10 = arith.constant 0 : index
    %c0_11 = arith.constant 0 : index
    %c0_12 = arith.constant 0 : index
    %c0_13 = arith.constant 0 : index
    %15 = vector.load %arg5[%c0_10, %c0_11, %c0_12, %c0_13] : memref<1x2x16x16xf32, #tpu.memory_space<vmem>>, vector<1x2x16x16xf32>
    %16 = vector.shape_cast %15 : vector<1x2x16x16xf32> to vector<2x16x16xf32>
    %cst_14 = arith.constant dense<0.000000e+00> : vector<2x16x16xf32>
    %17 = tpu.matmul %12, %14, %cst_14 {dimension_numbers = #tpu.dot_dimension_numbers<[0], [0], [2], [2], [0, 1, 0, 2, 1, 2], [1], [1]>} : vector<8x2x16xf32>, vector<8x2x16xf32>, vector<2x16x16xf32> -> vector<2x16x16xf32>
    %18 = arith.addf %16, %17 : vector<2x16x16xf32>
    %c0_15 = arith.constant 0 : index
    %c0_16 = arith.constant 0 : index
    %c0_17 = arith.constant 0 : index
    %c0_18 = arith.constant 0 : index
    %19 = vector.load %arg5[%c0_15, %c0_16, %c0_17, %c0_18] : memref<1x2x16x16xf32, #tpu.memory_space<vmem>>, vector<1x2x16x16xf32>
    %20 = vector.shape_cast %19 : vector<1x2x16x16xf32> to vector<2x16x16xf32>
    %21 = vector.shape_cast %18 : vector<2x16x16xf32> to vector<1x2x16x16xf32>
    tpu.vector_store %arg5[%c0_15, %c0_16, %c0_17, %c0_18], %21 {strides = array<i32>} : memref<1x2x16x16xf32, #tpu.memory_space<vmem>>, vector<1x2x16x16xf32>,
    %cst_19 = arith.constant 1.000000e+00 : f32
    %22 = vector.broadcast %cst_19 : f32 to vector<8x2x1xf32>
    %c0_20 = arith.constant 0 : index
    %c0_21 = arith.constant 0 : index
    %c0_22 = arith.constant 0 : index
    %c0_23 = arith.constant 0 : index
    %23 = vector.load %arg6[%c0_20, %c0_21, %c0_22, %c0_23] : memref<1x2x16x1xf32, #tpu.memory_space<vmem>>, vector<1x2x16x1xf32>
    %24 = vector.shape_cast %23 : vector<1x2x16x1xf32> to vector<2x16x1xf32>
    %cst_24 = arith.constant dense<0.000000e+00> : vector<2x16x1xf32>
    %25 = tpu.matmul %12, %22, %cst_24 {dimension_numbers = #tpu.dot_dimension_numbers<[0], [0], [2], [2], [0, 1, 0, 2, 1, 2], [1], [1]>} : vector<8x2x16xf32>, vector<8x2x1xf32>, vector<2x16x1xf32> -> vector<2x16x1xf32>
    %26 = arith.addf %24, %25 : vector<2x16x1xf32>
    %c0_25 = arith.constant 0 : index
    %c0_26 = arith.constant 0 : index
    %c0_27 = arith.constant 0 : index
    %c0_28 = arith.constant 0 : index
    %27 = vector.load %arg6[%c0_25, %c0_26, %c0_27, %c0_28] : memref<1x2x16x1xf32, #tpu.memory_space<vmem>>, vector<1x2x16x1xf32>
    %28 = vector.shape_cast %27 : vector<1x2x16x1xf32> to vector<2x16x1xf32>
    %29 = vector.shape_cast %26 : vector<2x16x1xf32> to vector<1x2x16x1xf32>
    tpu.vector_store %arg6[%c0_25, %c0_26, %c0_27, %c0_28], %29 {strides = array<i32>} : memref<1x2x16x1xf32, #tpu.memory_space<vmem>>, vector<1x2x16x1xf32>,
    return
  }
  func.func @transform_0(%arg0: i32, %arg1: i32, %arg2: i32) -> (i32, i32, i32, i32) {
    %c0_i32 = arith.constant 0 : i32
    %c0_i32_0 = arith.constant 0 : i32
    return %arg0, %arg2, %arg1, %c0_i32 : i32, i32, i32, i32
  }
  func.func @transform_1(%arg0: i32, %arg1: i32, %arg2: i32) -> (i32, i32, i32, i32) {
    %c0_i32 = arith.constant 0 : i32
    %c0_i32_0 = arith.constant 0 : i32
    return %arg0, %arg2, %arg1, %c0_i32 : i32, i32, i32, i32
  }
  func.func @transform_2(%arg0: i32, %arg1: i32, %arg2: i32) -> (i32, i32, i32, i32) {
    %c0_i32 = arith.constant 0 : i32
    %c0_i32_0 = arith.constant 0 : i32
    %c0_i32_1 = arith.constant 0 : i32
    return %arg0, %arg1, %c0_i32, %c0_i32_0 : i32, i32, i32, i32
  }
  func.func @transform_3(%arg0: i32, %arg1: i32, %arg2: i32) -> (i32, i32, i32, i32) {
    %c0_i32 = arith.constant 0 : i32
    %c0_i32_0 = arith.constant 0 : i32
    %c0_i32_1 = arith.constant 0 : i32
    return %arg0, %arg1, %c0_i32, %c0_i32_0 : i32, i32, i32, i32
  }
}

</mosaic_0001>

<llo_original>
// kernel: tpu_custom_call.1
$region0: #{tpu_custom_call.1}
  #allocation0 [shape = 'u32[]', space=smem, size = 0x4, offset = 0x4, fixed_abs, tag = 'smem constant byte address 0x4 - core index']
  #allocation1 [shape = 'u32[144,128]{1,0:T(1,128)}', space=vmem, size = 0x12000, scoped, tag = 'internal scratch']
  %s0 = inlined_call_operand.hbm [shape: f32[2,8,2,16], index: 0, kind: input, shape index: {}]
  %s1 = inlined_call_operand.hbm [shape: f32[2,8,2,16], index: 1, kind: input, shape index: {}]
  %s2 = inlined_call_operand.hbm [shape: f32[2,2,16,16], index: 2, kind: output, shape index: {0}]
  %s3 = inlined_call_operand.vmem [shape: f32[2,2,16,1], index: 3, kind: output, shape index: {1}]
  %4 = xla_tuple %s2, %s3
  %s5 = sld [smem:[#allocation0]]
  $region61: #{tpu_custom_call.1} parent=0
    _
  %s7 = ssub.s32 1, %s5
  %s8 = scalar_select 0, %s7, %s5
  $region1: #{tpu_custom_call.1} parent=0
    #allocation2 [shape = 'u8[16384]{0}', space=vmem, size = 0x4000, scoped, tag = 'input window, operand 0']
    #allocation3 [shape = 's32[2]{0}', space=sflag, size = 0x8, scoped, tag = 'scoped memory for tpu_custom_call.1']
    #allocation4 [shape = 's32[2]{0}', space=sflag, size = 0x8, scoped, tag = 'scoped memory for tpu_custom_call.1']
    #allocation5 [shape = 'u8[16384]{0}', space=vmem, size = 0x4000, scoped, tag = 'input window, operand 1']
    #allocation6 [shape = 's32[2]{0}', space=sflag, size = 0x8, scoped, tag = 'scoped memory for tpu_custom_call.1']
    #allocation7 [shape = 'u8[32768]{0}', space=vmem, size = 0x8000, scoped, tag = 'output window, operand 0']
    %9 = vsyncpa [#allocation3], 0
    %s10 = scalar_lea.sflag [#allocation3], 1
    %11 = vsyncpa %s10, 0
    %12 = vsyncpa [#allocation6], 0
    %s13 = scalar_lea.sflag [#allocation6], 1
    %14 = vsyncpa %s13, 0
    %15 = vsyncpa [#allocation4], 0
    %s16 = scalar_lea.sflag [#allocation4], 1
    %17 = vsyncpa %s16, 0
    loop: start=0, step=1, limit=4
    $region2: #{tpu_custom_call.1} parent=1 // loop_pre_header
      _
    $region3: #{tpu_custom_call.1} parent=1 // loop_header
      %s19 = sphi 0, %s23
      %p20 = scmp.ge.s32.totalorder %s19, 4
      %s26 = sphi 0, %s45
      %s27 = sphi 0, %s41
      %s28 = sphi 0, %s37
      %s29 = sphi 0, %s26
      %s30 = sphi 0, %s27
      %s31 = sphi 0, %s28
      %s32 = sphi 0, %s29
      %s33 = sphi 0, %s30
      %s34 = sphi 0, %s31
      %s52 = sphi 0, %s54
      %s55 = sphi 0, %s52
      %s56 = sphi 0, %s55
      %s72 = sphi 0, %s56
      %s82 = sphi 0, %s84
      %s85 = sphi 0, %s82
      %s86 = sphi 0, %s85
      %s102 = sphi 0, %s86
      %s110 = sphi 0, %s112
      %s113 = sphi 0, %s110
      %s114 = sphi 0, %s113
      %s130 = sphi 0, %s114
      %s138 = sphi 0, %s140
      %s141 = sphi 0, %s138
      %s142 = sphi 0, %s141
      %s158 = sphi 0, %s142
    $region4: #{tpu_custom_call.1} parent=1 // loop_header_branch
      %22 = sbr.rel (%p20) target = $region8
    $region5: #{tpu_custom_call.1} parent=1 // loop_body
      %s24 = ssub.s32 %s19, 1
      %s25 = ssub.s32 %s19, 2
      %s35 = sadd.s32 1, %s28
      %p36 = scmp.ge.s32.totalorder %s35, 1
      %s37 = scalar_select %p36, 0, %s35
      %s38 = sadd.s32 1, %s27
      %s39 = scalar_select %p36, %s38, %s27
      %p40 = scmp.ge.s32.totalorder %s39, 1
      %s41 = scalar_select %p40, 0, %s39
      %s42 = sadd.s32 1, %s26
      %s43 = scalar_select %p40, %s42, %s26
      %p44 = scmp.ge.s32.totalorder %s43, 2
      %s45 = scalar_select %p44, 0, %s43
      %s46 = ssub.s32 %s26, %s45
      %s47 = ssub.s32 %s28, %s37
      %s48 = sor.u32 %s46, %s47
      %s49 = ssub.s32 %s27, %s41
      %s50 = sor.u32 %s48, %s49
      %p51 = scmp.eq.s32.totalorder %s50, 0
      %s53 = sadd.s32 %s52, 1
      %s54 = scalar_select %p51, %s52, %s53
      %p57 = pneg %p51
      %p58 = scmp.eq.s32.totalorder %s19, 1
      %p59 = por %p57, %p58
      %p60 = scmp.ne.s32.totalorder %s52, %s55
      %p61 = scmp.eq.s32.totalorder %s19, 0
      %p62 = por %p60, %p61
      %p63 = scmp.ne.s32.totalorder %s52, %s55
      %p64 = scmp.eq.s32.totalorder %s24, 1
      %p65 = por %p63, %p64
      %p66 = scmp.ne.s32.totalorder %s55, %s56
      %p67 = scmp.eq.s32.totalorder %s24, 0
      %p68 = por %p66, %p67
      %p69 = scmp.ne.s32.totalorder %s55, %s56
      %p70 = scmp.eq.s32.totalorder %s25, 1
      %p71 = por %p69, %p70
      %p73 = scmp.ne.s32.totalorder %s56, %s72
      %p74 = scmp.eq.s32.totalorder %s25, 0
      %p75 = por %p73, %p74
      %s76 = ssub.s32 %s26, %s45
      %s77 = ssub.s32 %s28, %s37
      %s78 = sor.u32 %s76, %s77
      %s79 = ssub.s32 %s27, %s41
      %s80 = sor.u32 %s78, %s79
      %p81 = scmp.eq.s32.totalorder %s80, 0
      %s83 = sadd.s32 %s82, 1
      %s84 = scalar_select %p81, %s82, %s83
      %p87 = pneg %p81
      %p88 = scmp.eq.s32.totalorder %s19, 1
      %p89 = por %p87, %p88
      %p90 = scmp.ne.s32.totalorder %s82, %s85
      %p91 = scmp.eq.s32.totalorder %s19, 0
      %p92 = por %p90, %p91
      %p93 = scmp.ne.s32.totalorder %s82, %s85
      %p94 = scmp.eq.s32.totalorder %s24, 1
      %p95 = por %p93, %p94
      %p96 = scmp.ne.s32.totalorder %s85, %s86
      %p97 = scmp.eq.s32.totalorder %s24, 0
      %p98 = por %p96, %p97
      %p99 = scmp.ne.s32.totalorder %s85, %s86
      %p100 = scmp.eq.s32.totalorder %s25, 1
      %p101 = por %p99, %p100
      %p103 = scmp.ne.s32.totalorder %s86, %s102
      %p104 = scmp.eq.s32.totalorder %s25, 0
      %p105 = por %p103, %p104
      %s106 = ssub.s32 %s26, %s45
      %s107 = ssub.s32 %s27, %s41
      %s108 = sor.u32 %s106, %s107
      %p109 = scmp.eq.s32.totalorder %s108, 0
      %s111 = sadd.s32 %s110, 1
      %s112 = scalar_select %p109, %s110, %s111
      %p115 = pneg %p109
      %p116 = scmp.eq.s32.totalorder %s19, 1
      %p117 = por %p115, %p116
      %p118 = scmp.ne.s32.totalorder %s110, %s113
      %p119 = scmp.eq.s32.totalorder %s19, 0
      %p120 = por %p118, %p119
      %p121 = scmp.ne.s32.totalorder %s110, %s113
      %p122 = scmp.eq.s32.totalorder %s24, 1
      %p123 = por %p121, %p122
      %p124 = scmp.ne.s32.totalorder %s113, %s114
      %p125 = scmp.eq.s32.totalorder %s24, 0
      %p126 = por %p124, %p125
      %p127 = scmp.ne.s32.totalorder %s113, %s114
      %p128 = scmp.eq.s32.totalorder %s25, 1
      %p129 = por %p127, %p128
      %p131 = scmp.ne.s32.totalorder %s114, %s130
      %p132 = scmp.eq.s32.totalorder %s25, 0
      %p133 = por %p131, %p132
      %s134 = ssub.s32 %s26, %s45
      %s135 = ssub.s32 %s27, %s41
      %s136 = sor.u32 %s134, %s135
      %p137 = scmp.eq.s32.totalorder %s136, 0
      %s139 = sadd.s32 %s138, 1
      %s140 = scalar_select %p137, %s138, %s139
      %p143 = pneg %p137
      %p144 = scmp.eq.s32.totalorder %s19, 1
      %p145 = por %p143, %p144
      %p146 = scmp.ne.s32.totalorder %s138, %s141
      %p147 = scmp.eq.s32.totalorder %s19, 0
      %p148 = por %p146, %p147
      %p149 = scmp.ne.s32.totalorder %s138, %s141
      %p150 = scmp.eq.s32.totalorder %s24, 1
      %p151 = por %p149, %p150
      %p152 = scmp.ne.s32.totalorder %s141, %s142
      %p153 = scmp.eq.s32.totalorder %s24, 0
      %p154 = por %p152, %p153
      %p155 = scmp.ne.s32.totalorder %s141, %s142
      %p156 = scmp.eq.s32.totalorder %s25, 1
      %p157 = por %p155, %p156
      %p159 = scmp.ne.s32.totalorder %s142, %s158
      %p160 = scmp.eq.s32.totalorder %s25, 0
      %p161 = por %p159, %p160
      %p162 = scmp.le.s32.totalorder 1, %s19
      %p163 = scmp.lt.s32.totalorder %s19, 3
      %p164 = pnand %p162, %p163
      %p165 = pneg %p164
      // Predicated region
      $region9: #{tpu_custom_call.1} parent=5 // pred_check
        _
      $region10: #{tpu_custom_call.1} parent=5 // pred_check_branch
        %167 = sbr.rel (%p164) target = $region12
      $region11: #{tpu_custom_call.1} parent=5 // pred_region
        %s168 = ssub.s32 %s19, 1
      $region12: #{tpu_custom_call.1} parent=5 // pred_fallthru
        _
      %p169 = scmp.lt.s32.totalorder %s19, 2
      // Predicated region
      $region13: #{tpu_custom_call.1} parent=5 // pred_check
        %p170 = pneg %p169
      $region14: #{tpu_custom_call.1} parent=5 // pred_check_branch
        %172 = sbr.rel (%p170) target = $region16
      $region15: #{tpu_custom_call.1} parent=5 // pred_region
        // Predicated region
        $region17: #{tpu_custom_call.1} parent=15 // pred_check
          %p173 = pneg %p62
        $region18: #{tpu_custom_call.1} parent=15 // pred_check_branch
          %175 = sbr.rel (%p173) target = $region20
        $region19: #{tpu_custom_call.1} parent=15 // pred_region
          %s176 = sand.u32 %s52, 1
          %s177 = scalar_lea.sflag [#allocation3], %s176
          %s178 = sand.u32 %s52, 1
          %s179 = smul.addr %s178, 16
          %s180 = scalar_lea.vmem [#allocation2], %s179
          %s181 = smul.u32 8, %s28
          %s183 = ssub.s32 256, 256
          %184 = vsyncadd %s177, %s183
          %s185 = sadd.s32 %s27, %s181
          %s186 = smul.addr %s26, 8
          %s187 = sadd.s32 %s185, %s186
          %s188 = smul.addr %s187, 32
          %s189 = scalar_lea.hbm %s0, %s188
          %s190 = sshll.u32 %s180, 4
          %s191 = int_to_ptr.vmem [resolvable:$true] %s190
          %196 = dma.hbm_to_vmem [thread:$0]  %s189, 256, %s191, %s177, 32, 32, 2
        $region20: #{tpu_custom_call.1} parent=15 // pred_fallthru
          _
        // Predicated region
        $region21: #{tpu_custom_call.1} parent=15 // pred_check
          %p197 = pneg %p92
        $region22: #{tpu_custom_call.1} parent=15 // pred_check_branch
          %199 = sbr.rel (%p197) target = $region24
        $region23: #{tpu_custom_call.1} parent=15 // pred_region
          %s200 = sand.u32 %s82, 1
          %s201 = scalar_lea.sflag [#allocation6], %s200
          %s202 = sand.u32 %s82, 1
          %s203 = smul.addr %s202, 16
          %s204 = scalar_lea.vmem [#allocation5], %s203
          %s205 = smul.u32 8, %s28
          %s207 = ssub.s32 256, 256
          %208 = vsyncadd %s201, %s207
          %s209 = sadd.s32 %s27, %s205
          %s210 = smul.addr %s26, 8
          %s211 = sadd.s32 %s209, %s210
          %s212 = smul.addr %s211, 32
          %s213 = scalar_lea.hbm %s1, %s212
          %s214 = sshll.u32 %s204, 4
          %s215 = int_to_ptr.vmem [resolvable:$true] %s214
          %220 = dma.hbm_to_vmem [thread:$0]  %s213, 256, %s215, %s201, 32, 32, 2
        $region24: #{tpu_custom_call.1} parent=15 // pred_fallthru
          _
      $region16: #{tpu_custom_call.1} parent=5 // pred_fallthru
        _
      %p221 = scmp.le.s32.totalorder 1, %s19
      %p222 = scmp.lt.s32.totalorder %s19, 3
      %p223 = pnand %p221, %p222
      %p224 = pneg %p223
      // Predicated region
      $region25: #{tpu_custom_call.1} parent=5 // pred_check
        _
      $region26: #{tpu_custom_call.1} parent=5 // pred_check_branch
        %226 = sbr.rel (%p223) target = $region28
      $region27: #{tpu_custom_call.1} parent=5 // pred_region
        %s227 = ssub.s32 %s19, 1
        %s228 = sand.u32 %s55, 1
        %s229 = scalar_lea.sflag [#allocation3], %s228
        %s230 = sand.u32 %s55, 1
        %s231 = smul.addr %s230, 16
        %s232 = scalar_lea.vmem [#allocation2], %s231
        // Predicated region
        $region29: #{tpu_custom_call.1} parent=27 // pred_check
          %p233 = pneg %p68
        $region30: #{tpu_custom_call.1} parent=27 // pred_check_branch
          %235 = sbr.rel (%p233) target = $region32
        $region31: #{tpu_custom_call.1} parent=27 // pred_region
          %236 = dma.done %s229, 256
        $region32: #{tpu_custom_call.1} parent=27 // pred_fallthru
          _
        %s237 = sand.u32 %s85, 1
        %s238 = scalar_lea.sflag [#allocation6], %s237
        %s239 = sand.u32 %s85, 1
        %s240 = smul.addr %s239, 16
        %s241 = scalar_lea.vmem [#allocation5], %s240
        // Predicated region
        $region33: #{tpu_custom_call.1} parent=27 // pred_check
          %p242 = pneg %p98
        $region34: #{tpu_custom_call.1} parent=27 // pred_check_branch
          %244 = sbr.rel (%p242) target = $region36
        $region35: #{tpu_custom_call.1} parent=27 // pred_region
          %245 = dma.done %s238, 256
        $region36: #{tpu_custom_call.1} parent=27 // pred_fallthru
          _
        %s246 = sand.u32 %s55, 1
        %s247 = scalar_lea.sflag [#allocation3], %s246
        %s248 = sand.u32 %s55, 1
        %s249 = smul.addr %s248, 16
        %s250 = scalar_lea.vmem [#allocation2], %s249
        %p251 = pneg %p68
        %p252 = pneg %p65
        %s253 = sand.u32 %s85, 1
        %s254 = scalar_lea.sflag [#allocation6], %s253
        %s255 = sand.u32 %s85, 1
        %s256 = smul.addr %s255, 16
        %s257 = scalar_lea.vmem [#allocation5], %s256
        %p258 = pneg %p98
        %p259 = pneg %p95
        %p260 = pneg %p126
        %p261 = pneg %p123
        %s262 = sand.u32 %s113, 1
        %s263 = scalar_lea.sflag [#allocation4], %s262
        %s264 = sand.u32 %s113, 1
        %s265 = smul.addr %s264, 32
        %s266 = scalar_lea.vmem [#allocation7], %s265
        %p267 = pneg %p154
        %p268 = pneg %p151
        %s269 = smul.u32 2, %s30
        %p270 = scmp.lt.s32.totalorder %s29, 1
        %s271 = scalar_select %p270, %s29, 1
        %p272 = scmp.lt.s32.totalorder %s269, 1
        %s273 = scalar_select %p272, %s269, 1
        %s274 = smul.addr %s273, 2
        %s275 = smul.addr %s271, 4
        %s276 = sadd.s32 %s274, %s275
        %s277 = smul.addr %s276, 8
        %s278 = scalar_lea.vmem %s3, %s277
        %s279 = smul.u32 8, %s31
        %s280 = smul.u32 8, %s31
        %s281 = smul.u32 2, %s30
        %s282 = smul.u32 2, %s30
        %p283 = scmp.lt.s32.totalorder %s29, 1
        %s284 = scalar_select %p283, %s29, 1
        %p285 = scmp.lt.s32.totalorder %s282, 1
        %s286 = scalar_select %p285, %s282, 1
        %s287 = smul.addr %s286, 2
        %s288 = smul.addr %s284, 4
        %s289 = sadd.s32 %s287, %s288
        %s290 = smul.addr %s289, 8
        %s291 = scalar_lea.vmem %s3, %s290
        %s292 = smul.u32 2, %s30
        %p293 = scmp.eq.s32.totalorder %s31, 0
        // Predicated region
        $region37: #{tpu_custom_call.1} parent=27 // pred_check
          %p294 = pneg %p293
        $region38: #{tpu_custom_call.1} parent=27 // pred_check_branch
          %296 = sbr.rel (%p294) target = $region40
        $region39: #{tpu_custom_call.1} parent=27 // pred_region
          %vm297 = vcmask 130048
          %298 = vst.msk [vmem:[%s266] sm:$0xff] %vm297, 0.0
          %299 = vst.msk [vmem:[%s266 + $0x8] sm:$0xff] %vm297, 0.0
          %300 = vst.msk [vmem:[%s266 + $0x10] sm:$0xff] %vm297, 0.0
          %301 = vst.msk [vmem:[%s266 + $0x18] sm:$0xff] %vm297, 0.0
          %vm302 = vcmask 7168
          %303 = vst.msk [vmem:[%s291] sm:$0xff] %vm302, 0.0
          %304 = vst.msk [vmem:[%s291 + $0x8] sm:$0xff] %vm302, 0.0
          %305 = vst.msk [vmem:[%s291 + $0x10] sm:$0xff] %vm302, 0.0
          %306 = vst.msk [vmem:[%s291 + $0x18] sm:$0xff] %vm302, 0.0
        $region40: #{tpu_custom_call.1} parent=27 // pred_fallthru
          _
        %v307 = vld [vmem:[%s232] sm:$0x3]
        %v308 = vld [vmem:[%s232 + $0x2] sm:$0x3]
        %v309 = vld [vmem:[%s232 + $0x4] sm:$0x3]
        %v310 = vld [vmem:[%s232 + $0x6] sm:$0x3]
        %v311 = vld [vmem:[%s232 + $0x8] sm:$0x3]
        %v312 = vld [vmem:[%s232 + $0xa] sm:$0x3]
        %v313 = vld [vmem:[%s232 + $0xc] sm:$0x3]
        %v314 = vld [vmem:[%s232 + $0xe] sm:$0x3]
        %v315 = vmul.f32 %v307, 0.5
        %v316 = vmul.f32 %v308, 0.5
        %v317 = vmul.f32 %v309, 0.5
        %v318 = vmul.f32 %v310, 0.5
        %v319 = vmul.f32 %v311, 0.5
        %v320 = vmul.f32 %v312, 0.5
        %v321 = vmul.f32 %v313, 0.5
        %v322 = vmul.f32 %v314, 0.5
        %vm323 = vcmp.gt.f32.partialorder %v315, 0.0
        %vm324 = vcmp.gt.f32.partialorder %v316, 0.0
        %vm325 = vcmp.gt.f32.partialorder %v317, 0.0
        %vm326 = vcmp.gt.f32.partialorder %v318, 0.0
        %vm327 = vcmp.gt.f32.partialorder %v319, 0.0
        %vm328 = vcmp.gt.f32.partialorder %v320, 0.0
        %vm329 = vcmp.gt.f32.partialorder %v321, 0.0
        %vm330 = vcmp.gt.f32.partialorder %v322, 0.0
        %v331 = vadd.f32 %v315, 1.0
        %v332 = vadd.f32 %v316, 1.0
        %v333 = vadd.f32 %v317, 1.0
        %v334 = vadd.f32 %v318, 1.0
        %v335 = vadd.f32 %v319, 1.0
        %v336 = vadd.f32 %v320, 1.0
        %v337 = vadd.f32 %v321, 1.0
        %v338 = vadd.f32 %v322, 1.0
        %v339 = vmul.f32 %v315, 1.442695
        %v340 = vpow.pop %v339
        %v341 = vmul.f32 %v316, 1.442695
        %v342 = vpow.pop %v341
        %v343 = vmul.f32 %v317, 1.442695
        %v344 = vpow.pop %v343
        %v345 = vmul.f32 %v318, 1.442695
        %v346 = vpow.pop %v345
        %v347 = vmul.f32 %v319, 1.442695
        %v348 = vpow.pop %v347
        %v349 = vmul.f32 %v320, 1.442695
        %v350 = vpow.pop %v349
        %v351 = vmul.f32 %v321, 1.442695
        %v352 = vpow.pop %v351
        %v353 = vmul.f32 %v322, 1.442695
        %v354 = vpow.pop %v353
        %v355 = vsel %vm323, %v331, %v340
        %v356 = vsel %vm324, %v332, %v342
        %v357 = vsel %vm325, %v333, %v344
        %v358 = vsel %vm326, %v334, %v346
        %v359 = vsel %vm327, %v335, %v348
        %v360 = vsel %vm328, %v336, %v350
        %v361 = vsel %vm329, %v337, %v352
        %v362 = vsel %vm330, %v338, %v354
        %v363 = vld [vmem:[%s241] sm:$0x3]
        %v364 = vld [vmem:[%s241 + $0x2] sm:$0x3]
        %v365 = vld [vmem:[%s241 + $0x4] sm:$0x3]
        %v366 = vld [vmem:[%s241 + $0x6] sm:$0x3]
        %v367 = vld [vmem:[%s241 + $0x8] sm:$0x3]
        %v368 = vld [vmem:[%s241 + $0xa] sm:$0x3]
        %v369 = vld [vmem:[%s241 + $0xc] sm:$0x3]
        %v370 = vld [vmem:[%s241 + $0xe] sm:$0x3]
        %v371 = vld [vmem:[%s266] sm:$0xff]
        %v372 = vld [vmem:[%s266 + $0x8] sm:$0xff]
        %v373 = vld [vmem:[%s266 + $0x10] sm:$0xff]
        %v374 = vld [vmem:[%s266 + $0x18] sm:$0xff]
        %375 = vxpose.xlu0.b32.start [1/16] %v355, 128
        %376 = vxpose.xlu0.b32.cont [2/16] 0.0, 128
        %377 = vxpose.xlu0.b32.cont [3/16] 0.0, 128
        %378 = vxpose.xlu0.b32.cont [4/16] 0.0, 128
        %379 = vxpose.xlu0.b32.cont [5/16] 0.0, 128
        %380 = vxpose.xlu0.b32.cont [6/16] 0.0, 128
        %381 = vxpose.xlu0.b32.cont [7/16] 0.0, 128
        %382 = vxpose.xlu0.b32.cont [8/16] 0.0, 128
        %383 = vxpose.xlu0.b32.cont [9/16] 0.0, 128
        %384 = vxpose.xlu0.b32.cont [10/16] 0.0, 128
        %385 = vxpose.xlu0.b32.cont [11/16] 0.0, 128
        %386 = vxpose.xlu0.b32.cont [12/16] 0.0, 128
        %387 = vxpose.xlu0.b32.cont [13/16] 0.0, 128
        %388 = vxpose.xlu0.b32.cont [14/16] 0.0, 128
        %389 = vxpose.xlu0.b32.cont [15/16] 0.0, 128
        %390 = vxpose.xlu0.b32.end [16/16] 0.0, 128
        %v391 = vpop.trf.xlu0
        %v392 = vpop.trf.xlu0
        %v393 = vpop.trf.xlu0
        %v394 = vpop.trf.xlu0
        %v395 = vpop.trf.xlu0
        %v396 = vpop.trf.xlu0
        %v397 = vpop.trf.xlu0
        %v398 = vpop.trf.xlu0
        %v399 = vpop.trf.xlu0
        %v400 = vpop.trf.xlu0
        %v401 = vpop.trf.xlu0
        %v402 = vpop.trf.xlu0
        %v403 = vpop.trf.xlu0
        %v404 = vpop.trf.xlu0
        %v405 = vpop.trf.xlu0
        %v406 = vpop.trf.xlu0
        %407 = vxpose.xlu0.b32.start [1/16] %v356, 128
        %408 = vxpose.xlu0.b32.cont [2/16] 0.0, 128
        %409 = vxpose.xlu0.b32.cont [3/16] 0.0, 128
        %410 = vxpose.xlu0.b32.cont [4/16] 0.0, 128
        %411 = vxpose.xlu0.b32.cont [5/16] 0.0, 128
        %412 = vxpose.xlu0.b32.cont [6/16] 0.0, 128
        %413 = vxpose.xlu0.b32.cont [7/16] 0.0, 128
        %414 = vxpose.xlu0.b32.cont [8/16] 0.0, 128
        %415 = vxpose.xlu0.b32.cont [9/16] 0.0, 128
        %416 = vxpose.xlu0.b32.cont [10/16] 0.0, 128
        %417 = vxpose.xlu0.b32.cont [11/16] 0.0, 128
        %418 = vxpose.xlu0.b32.cont [12/16] 0.0, 128
        %419 = vxpose.xlu0.b32.cont [13/16] 0.0, 128
        %420 = vxpose.xlu0.b32.cont [14/16] 0.0, 128
        %421 = vxpose.xlu0.b32.cont [15/16] 0.0, 128
        %422 = vxpose.xlu0.b32.end [16/16] 0.0, 128
        %v423 = vpop.trf.xlu0
        %v424 = vpop.trf.xlu0
        %v425 = vpop.trf.xlu0
        %v426 = vpop.trf.xlu0
        %v427 = vpop.trf.xlu0
        %v428 = vpop.trf.xlu0
        %v429 = vpop.trf.xlu0
        %v430 = vpop.trf.xlu0
        %v431 = vpop.trf.xlu0
        %v432 = vpop.trf.xlu0
        %v433 = vpop.trf.xlu0
        %v434 = vpop.trf.xlu0
        %v435 = vpop.trf.xlu0
        %v436 = vpop.trf.xlu0
        %v437 = vpop.trf.xlu0
        %v438 = vpop.trf.xlu0
        %439 = vxpose.xlu0.b32.start [1/16] %v357, 128
        %440 = vxpose.xlu0.b32.cont [2/16] 0.0, 128
        %441 = vxpose.xlu0.b32.cont [3/16] 0.0, 128
        %442 = vxpose.xlu0.b32.cont [4/16] 0.0, 128
        %443 = vxpose.xlu0.b32.cont [5/16] 0.0, 128
        %444 = vxpose.xlu0.b32.cont [6/16] 0.0, 128
        %445 = vxpose.xlu0.b32.cont [7/16] 0.0, 128
        %446 = vxpose.xlu0.b32.cont [8/16] 0.0, 128
        %447 = vxpose.xlu0.b32.cont [9/16] 0.0, 128
        %448 = vxpose.xlu0.b32.cont [10/16] 0.0, 128
        %449 = vxpose.xlu0.b32.cont [11/16] 0.0, 128
        %450 = vxpose.xlu0.b32.cont [12/16] 0.0, 128
        %451 = vxpose.xlu0.b32.cont [13/16] 0.0, 128
        %452 = vxpose.xlu0.b32.cont [14/16] 0.0, 128
        %453 = vxpose.xlu0.b32.cont [15/16] 0.0, 128
        %454 = vxpose.xlu0.b32.end [16/16] 0.0, 128
        %v455 = vpop.trf.xlu0
        %v456 = vpop.trf.xlu0
        %v457 = vpop.trf.xlu0
        %v458 = vpop.trf.xlu0
        %v459 = vpop.trf.xlu0
        %v460 = vpop.trf.xlu0
        %v461 = vpop.trf.xlu0
        %v462 = vpop.trf.xlu0
        %v463 = vpop.trf.xlu0
        %v464 = vpop.trf.xlu0
        %v465 = vpop.trf.xlu0
        %v466 = vpop.trf.xlu0
        %v467 = vpop.trf.xlu0
        %v468 = vpop.trf.xlu0
        %v469 = vpop.trf.xlu0
        %v470 = vpop.trf.xlu0
        %471 = vxpose.xlu0.b32.start [1/16] %v358, 128
        %472 = vxpose.xlu0.b32.cont [2/16] 0.0, 128
        %473 = vxpose.xlu0.b32.cont [3/16] 0.0, 128
        %474 = vxpose.xlu0.b32.cont [4/16] 0.0, 128
        %475 = vxpose.xlu0.b32.cont [5/16] 0.0, 128
        %476 = vxpose.xlu0.b32.cont [6/16] 0.0, 128
        %477 = vxpose.xlu0.b32.cont [7/16] 0.0, 128
        %478 = vxpose.xlu0.b32.cont [8/16] 0.0, 128
        %479 = vxpose.xlu0.b32.cont [9/16] 0.0, 128
        %480 = vxpose.xlu0.b32.cont [10/16] 0.0, 128
        %481 = vxpose.xlu0.b32.cont [11/16] 0.0, 128
        %482 = vxpose.xlu0.b32.cont [12/16] 0.0, 128
        %483 = vxpose.xlu0.b32.cont [13/16] 0.0, 128
        %484 = vxpose.xlu0.b32.cont [14/16] 0.0, 128
        %485 = vxpose.xlu0.b32.cont [15/16] 0.0, 128
        %486 = vxpose.xlu0.b32.end [16/16] 0.0, 128
        %v487 = vpop.trf.xlu0
        %v488 = vpop.trf.xlu0
        %v489 = vpop.trf.xlu0
        %v490 = vpop.trf.xlu0
        %v491 = vpop.trf.xlu0
        %v492 = vpop.trf.xlu0
        %v493 = vpop.trf.xlu0
        %v494 = vpop.trf.xlu0
        %v495 = vpop.trf.xlu0
        %v496 = vpop.trf.xlu0
        %v497 = vpop.trf.xlu0
        %v498 = vpop.trf.xlu0
        %v499 = vpop.trf.xlu0
        %v500 = vpop.trf.xlu0
        %v501 = vpop.trf.xlu0
        %v502 = vpop.trf.xlu0
        %503 = vxpose.xlu0.b32.start [1/16] %v359, 128
        %504 = vxpose.xlu0.b32.cont [2/16] 0.0, 128
        %505 = vxpose.xlu0.b32.cont [3/16] 0.0, 128
        %506 = vxpose.xlu0.b32.cont [4/16] 0.0, 128
        %507 = vxpose.xlu0.b32.cont [5/16] 0.0, 128
        %508 = vxpose.xlu0.b32.cont [6/16] 0.0, 128
        %509 = vxpose.xlu0.b32.cont [7/16] 0.0, 128
        %510 = vxpose.xlu0.b32.cont [8/16] 0.0, 128
        %511 = vxpose.xlu0.b32.cont [9/16] 0.0, 128
        %512 = vxpose.xlu0.b32.cont [10/16] 0.0, 128
        %513 = vxpose.xlu0.b32.cont [11/16] 0.0, 128
        %514 = vxpose.xlu0.b32.cont [12/16] 0.0, 128
        %515 = vxpose.xlu0.b32.cont [13/16] 0.0, 128
        %516 = vxpose.xlu0.b32.cont [14/16] 0.0, 128
        %517 = vxpose.xlu0.b32.cont [15/16] 0.0, 128
        %518 = vxpose.xlu0.b32.end [16/16] 0.0, 128
        %v519 = vpop.trf.xlu0
        %v520 = vpop.trf.xlu0
        %v521 = vpop.trf.xlu0
        %v522 = vpop.trf.xlu0
        %v523 = vpop.trf.xlu0
        %v524 = vpop.trf.xlu0
        %v525 = vpop.trf.xlu0
        %v526 = vpop.trf.xlu0
        %v527 = vpop.trf.xlu0
        %v528 = vpop.trf.xlu0
        %v529 = vpop.trf.xlu0
        %v530 = vpop.trf.xlu0
        %v531 = vpop.trf.xlu0
        %v532 = vpop.trf.xlu0
        %v533 = vpop.trf.xlu0
        %v534 = vpop.trf.xlu0
        %535 = vxpose.xlu0.b32.start [1/16] %v360, 128
        %536 = vxpose.xlu0.b32.cont [2/16] 0.0, 128
        %537 = vxpose.xlu0.b32.cont [3/16] 0.0, 128
        %538 = vxpose.xlu0.b32.cont [4/16] 0.0, 128
        %539 = vxpose.xlu0.b32.cont [5/16] 0.0, 128
        %540 = vxpose.xlu0.b32.cont [6/16] 0.0, 128
        %541 = vxpose.xlu0.b32.cont [7/16] 0.0, 128
        %542 = vxpose.xlu0.b32.cont [8/16] 0.0, 128
        %543 = vxpose.xlu0.b32.cont [9/16] 0.0, 128
        %544 = vxpose.xlu0.b32.cont [10/16] 0.0, 128
        %545 = vxpose.xlu0.b32.cont [11/16] 0.0, 128
        %546 = vxpose.xlu0.b32.cont [12/16] 0.0, 128
        %547 = vxpose.xlu0.b32.cont [13/16] 0.0, 128
        %548 = vxpose.xlu0.b32.cont [14/16] 0.0, 128
        %549 = vxpose.xlu0.b32.cont [15/16] 0.0, 128
        %550 = vxpose.xlu0.b32.end [16/16] 0.0, 128
        %v551 = vpop.trf.xlu0
        %v552 = vpop.trf.xlu0
        %v553 = vpop.trf.xlu0
        %v554 = vpop.trf.xlu0
        %v555 = vpop.trf.xlu0
        %v556 = vpop.trf.xlu0
        %v557 = vpop.trf.xlu0
        %v558 = vpop.trf.xlu0
        %v559 = vpop.trf.xlu0
        %v560 = vpop.trf.xlu0
        %v561 = vpop.trf.xlu0
        %v562 = vpop.trf.xlu0
        %v563 = vpop.trf.xlu0
        %v564 = vpop.trf.xlu0
        %v565 = vpop.trf.xlu0
        %v566 = vpop.trf.xlu0
        %567 = vxpose.xlu0.b32.start [1/16] %v361, 128
        %568 = vxpose.xlu0.b32.cont [2/16] 0.0, 128
        %569 = vxpose.xlu0.b32.cont [3/16] 0.0, 128
        %570 = vxpose.xlu0.b32.cont [4/16] 0.0, 128
        %571 = vxpose.xlu0.b32.cont [5/16] 0.0, 128
        %572 = vxpose.xlu0.b32.cont [6/16] 0.0, 128
        %573 = vxpose.xlu0.b32.cont [7/16] 0.0, 128
        %574 = vxpose.xlu0.b32.cont [8/16] 0.0, 128
        %575 = vxpose.xlu0.b32.cont [9/16] 0.0, 128
        %576 = vxpose.xlu0.b32.cont [10/16] 0.0, 128
        %577 = vxpose.xlu0.b32.cont [11/16] 0.0, 128
        %578 = vxpose.xlu0.b32.cont [12/16] 0.0, 128
        %579 = vxpose.xlu0.b32.cont [13/16] 0.0, 128
        %580 = vxpose.xlu0.b32.cont [14/16] 0.0, 128
        %581 = vxpose.xlu0.b32.cont [15/16] 0.0, 128
        %582 = vxpose.xlu0.b32.end [16/16] 0.0, 128
        %v583 = vpop.trf.xlu0
        %v584 = vpop.trf.xlu0
        %v585 = vpop.trf.xlu0
        %v586 = vpop.trf.xlu0
        %v587 = vpop.trf.xlu0
        %v588 = vpop.trf.xlu0
        %v589 = vpop.trf.xlu0
        %v590 = vpop.trf.xlu0
        %v591 = vpop.trf.xlu0
        %v592 = vpop.trf.xlu0
        %v593 = vpop.trf.xlu0
        %v594 = vpop.trf.xlu0
        %v595 = vpop.trf.xlu0
        %v596 = vpop.trf.xlu0
        %v597 = vpop.trf.xlu0
        %v598 = vpop.trf.xlu0
        %599 = vxpose.xlu0.b32.start [1/16] %v362, 128
        %600 = vxpose.xlu0.b32.cont [2/16] 0.0, 128
        %601 = vxpose.xlu0.b32.cont [3/16] 0.0, 128
        %602 = vxpose.xlu0.b32.cont [4/16] 0.0, 128
        %603 = vxpose.xlu0.b32.cont [5/16] 0.0, 128
        %604 = vxpose.xlu0.b32.cont [6/16] 0.0, 128
        %605 = vxpose.xlu0.b32.cont [7/16] 0.0, 128
        %606 = vxpose.xlu0.b32.cont [8/16] 0.0, 128
        %607 = vxpose.xlu0.b32.cont [9/16] 0.0, 128
        %608 = vxpose.xlu0.b32.cont [10/16] 0.0, 128
        %609 = vxpose.xlu0.b32.cont [11/16] 0.0, 128
        %610 = vxpose.xlu0.b32.cont [12/16] 0.0, 128
        %611 = vxpose.xlu0.b32.cont [13/16] 0.0, 128
        %612 = vxpose.xlu0.b32.cont [14/16] 0.0, 128
        %613 = vxpose.xlu0.b32.cont [15/16] 0.0, 128
        %614 = vxpose.xlu0.b32.end [16/16] 0.0, 128
        %v615 = vpop.trf.xlu0
        %v616 = vpop.trf.xlu0
        %v617 = vpop.trf.xlu0
        %v618 = vpop.trf.xlu0
        %v619 = vpop.trf.xlu0
        %v620 = vpop.trf.xlu0
        %v621 = vpop.trf.xlu0
        %v622 = vpop.trf.xlu0
        %v623 = vpop.trf.xlu0
        %v624 = vpop.trf.xlu0
        %v625 = vpop.trf.xlu0
        %v626 = vpop.trf.xlu0
        %v627 = vpop.trf.xlu0
        %v628 = vpop.trf.xlu0
        %v629 = vpop.trf.xlu0
        %v630 = vpop.trf.xlu0
        %v631 = vcombine.low %v391, %v455
        %v632 = vcombine.high %v391, %v455
        %v634 = vunpack.c.l.s4 1983009808
        %v635 = vunpack.c.0.s8 %v634
        %v636 = vlaneseq
        %v637 = vshrl.u32 %v636, 7
        %v638 = vsub.s32 %v635, %v637
        %v639 = vrot.slane %v631, %v638
        %v641 = vunpack.c.l.s4 1983009808
        %v642 = vunpack.c.0.s8 %v641
        %v643 = vlaneseq
        %v644 = vshrl.u32 %v643, 7
        %v645 = vsub.s32 %v642, %v644
        %v646 = vrot.slane %v632, %v645
        %v647 = vcombine.low %v423, %v487
        %v648 = vcombine.high %v423, %v487
        %v650 = vunpack.c.l.s4 1983009808
        %v651 = vunpack.c.0.s8 %v650
        %v652 = vlaneseq
        %v653 = vshrl.u32 %v652, 7
        %v654 = vsub.s32 %v651, %v653
        %v655 = vrot.slane %v647, %v654
        %v657 = vunpack.c.l.s4 1983009808
        %v658 = vunpack.c.0.s8 %v657
        %v659 = vlaneseq
        %v660 = vshrl.u32 %v659, 7
        %v661 = vsub.s32 %v658, %v660
        %v662 = vrot.slane %v648, %v661
        %v663 = vcombine.low %v519, %v583
        %v664 = vcombine.high %v519, %v583
        %v666 = vunpack.c.l.s4 1983009808
        %v667 = vunpack.c.0.s8 %v666
        %v668 = vlaneseq
        %v669 = vshrl.u32 %v668, 7
        %v670 = vsub.s32 %v667, %v669
        %v671 = vrot.slane %v663, %v670
        %v673 = vunpack.c.l.s4 1983009808
        %v674 = vunpack.c.0.s8 %v673
        %v675 = vlaneseq
        %v676 = vshrl.u32 %v675, 7
        %v677 = vsub.s32 %v674, %v676
        %v678 = vrot.slane %v664, %v677
        %v679 = vcombine.low %v551, %v615
        %v680 = vcombine.high %v551, %v615
        %v682 = vunpack.c.l.s4 1983009808
        %v683 = vunpack.c.0.s8 %v682
        %v684 = vlaneseq
        %v685 = vshrl.u32 %v684, 7
        %v686 = vsub.s32 %v683, %v685
        %v687 = vrot.slane %v679, %v686
        %v689 = vunpack.c.l.s4 1983009808
        %v690 = vunpack.c.0.s8 %v689
        %v691 = vlaneseq
        %v692 = vshrl.u32 %v691, 7
        %v693 = vsub.s32 %v690, %v692
        %v694 = vrot.slane %v680, %v693
        %v695 = vcombine.low %v639, %v655
        %v696 = vcombine.high %v639, %v655
        %v698 = vunpack.c.l.s4 1934713408
        %v699 = vunpack.c.0.s8 %v698
        %v700 = vlaneseq
        %v701 = vshrl.u32 %v700, 7
        %v702 = vsub.s32 %v699, %v701
        %v703 = vrot.slane %v695, %v702
        %v705 = vunpack.c.l.s4 1934713408
        %v706 = vunpack.c.0.s8 %v705
        %v707 = vlaneseq
        %v708 = vshrl.u32 %v707, 7
        %v709 = vsub.s32 %v706, %v708
        %v710 = vrot.slane %v696, %v709
        %v711 = vcombine.low %v646, %v662
        %v712 = vcombine.high %v646, %v662
        %v714 = vunpack.c.l.s4 1934713408
        %v715 = vunpack.c.0.s8 %v714
        %v716 = vlaneseq
        %v717 = vshrl.u32 %v716, 7
        %v718 = vsub.s32 %v715, %v717
        %v719 = vrot.slane %v711, %v718
        %v721 = vunpack.c.l.s4 1934713408
        %v722 = vunpack.c.0.s8 %v721
        %v723 = vlaneseq
        %v724 = vshrl.u32 %v723, 7
        %v725 = vsub.s32 %v722, %v724
        %v726 = vrot.slane %v712, %v725
        %v727 = vcombine.low %v671, %v687
        %v728 = vcombine.high %v671, %v687
        %v730 = vunpack.c.l.s4 1934713408
        %v731 = vunpack.c.0.s8 %v730
        %v732 = vlaneseq
        %v733 = vshrl.u32 %v732, 7
        %v734 = vsub.s32 %v731, %v733
        %v735 = vrot.slane %v727, %v734
        %v737 = vunpack.c.l.s4 1934713408
        %v738 = vunpack.c.0.s8 %v737
        %v739 = vlaneseq
        %v740 = vshrl.u32 %v739, 7
        %v741 = vsub.s32 %v738, %v740
        %v742 = vrot.slane %v728, %v741
        %v743 = vcombine.low %v678, %v694
        %v744 = vcombine.high %v678, %v694
        %v746 = vunpack.c.l.s4 1934713408
        %v747 = vunpack.c.0.s8 %v746
        %v748 = vlaneseq
        %v749 = vshrl.u32 %v748, 7
        %v750 = vsub.s32 %v747, %v749
        %v751 = vrot.slane %v743, %v750
        %v753 = vunpack.c.l.s4 1934713408
        %v754 = vunpack.c.0.s8 %v753
        %v755 = vlaneseq
        %v756 = vshrl.u32 %v755, 7
        %v757 = vsub.s32 %v754, %v756
        %v758 = vrot.slane %v744, %v757
        %v759 = vcombine.low %v703, %v735
        %v760 = vcombine.high %v703, %v735
        %v761 = vcombine.low %v710, %v742
        %v762 = vcombine.high %v710, %v742
        %v763 = vcombine.low %v719, %v751
        %v764 = vcombine.high %v719, %v751
        %v765 = vcombine.low %v726, %v758
        %v766 = vcombine.high %v726, %v758
        %v767 = vcombine.low %v392, %v456
        %v768 = vcombine.high %v392, %v456
        %v770 = vunpack.c.l.s4 1983009808
        %v771 = vunpack.c.0.s8 %v770
        %v772 = vlaneseq
        %v773 = vshrl.u32 %v772, 7
        %v774 = vsub.s32 %v771, %v773
        %v775 = vrot.slane %v767, %v774
        %v777 = vunpack.c.l.s4 1983009808
        %v778 = vunpack.c.0.s8 %v777
        %v779 = vlaneseq
        %v780 = vshrl.u32 %v779, 7
        %v781 = vsub.s32 %v778, %v780
        %v782 = vrot.slane %v768, %v781
        %v783 = vcombine.low %v424, %v488
        %v784 = vcombine.high %v424, %v488
        %v786 = vunpack.c.l.s4 1983009808
        %v787 = vunpack.c.0.s8 %v786
        %v788 = vlaneseq
        %v789 = vshrl.u32 %v788, 7
        %v790 = vsub.s32 %v787, %v789
        %v791 = vrot.slane %v783, %v790
        %v793 = vunpack.c.l.s4 1983009808
        %v794 = vunpack.c.0.s8 %v793
        %v795 = vlaneseq
        %v796 = vshrl.u32 %v795, 7
        %v797 = vsub.s32 %v794, %v796
        %v798 = vrot.slane %v784, %v797
        %v799 = vcombine.low %v520, %v584
        %v800 = vcombine.high %v520, %v584
        %v802 = vunpack.c.l.s4 1983009808
        %v803 = vunpack.c.0.s8 %v802
        %v804 = vlaneseq
        %v805 = vshrl.u32 %v804, 7
        %v806 = vsub.s32 %v803, %v805
        %v807 = vrot.slane %v799, %v806
        %v809 = vunpack.c.l.s4 1983009808
        %v810 = vunpack.c.0.s8 %v809
        %v811 = vlaneseq
        %v812 = vshrl.u32 %v811, 7
        %v813 = vsub.s32 %v810, %v812
        %v814 = vrot.slane %v800, %v813
        %v815 = vcombine.low %v552, %v616
        %v816 = vcombine.high %v552, %v616
        %v818 = vunpack.c.l.s4 1983009808
        %v819 = vunpack.c.0.s8 %v818
        %v820 = vlaneseq
        %v821 = vshrl.u32 %v820, 7
        %v822 = vsub.s32 %v819, %v821
        %v823 = vrot.slane %v815, %v822
        %v825 = vunpack.c.l.s4 1983009808
        %v826 = vunpack.c.0.s8 %v825
        %v827 = vlaneseq
        %v828 = vshrl.u32 %v827, 7
        %v829 = vsub.s32 %v826, %v828
        %v830 = vrot.slane %v816, %v829
        %v831 = vcombine.low %v775, %v791
        %v832 = vcombine.high %v775, %v791
        %v834 = vunpack.c.l.s4 1934713408
        %v835 = vunpack.c.0.s8 %v834
        %v836 = vlaneseq
        %v837 = vshrl.u32 %v836, 7
        %v838 = vsub.s32 %v835, %v837
        %v839 = vrot.slane %v831, %v838
        %v841 = vunpack.c.l.s4 1934713408
        %v842 = vunpack.c.0.s8 %v841
        %v843 = vlaneseq
        %v844 = vshrl.u32 %v843, 7
        %v845 = vsub.s32 %v842, %v844
        %v846 = vrot.slane %v832, %v845
        %v847 = vcombine.low %v782, %v798
        %v848 = vcombine.high %v782, %v798
        %v850 = vunpack.c.l.s4 1934713408
        %v851 = vunpack.c.0.s8 %v850
        %v852 = vlaneseq
        %v853 = vshrl.u32 %v852, 7
        %v854 = vsub.s32 %v851, %v853
        %v855 = vrot.slane %v847, %v854
        %v857 = vunpack.c.l.s4 1934713408
        %v858 = vunpack.c.0.s8 %v857
        %v859 = vlaneseq
        %v860 = vshrl.u32 %v859, 7
        %v861 = vsub.s32 %v858, %v860
        %v862 = vrot.slane %v848, %v861
        %v863 = vcombine.low %v807, %v823
        %v864 = vcombine.high %v807, %v823
        %v866 = vunpack.c.l.s4 1934713408
        %v867 = vunpack.c.0.s8 %v866
        %v868 = vlaneseq
        %v869 = vshrl.u32 %v868, 7
        %v870 = vsub.s32 %v867, %v869
        %v871 = vrot.slane %v863, %v870
        %v873 = vunpack.c.l.s4 1934713408
        %v874 = vunpack.c.0.s8 %v873
        %v875 = vlaneseq
        %v876 = vshrl.u32 %v875, 7
        %v877 = vsub.s32 %v874, %v876
        %v878 = vrot.slane %v864, %v877
        %v879 = vcombine.low %v814, %v830
        %v880 = vcombine.high %v814, %v830
        %v882 = vunpack.c.l.s4 1934713408
        %v883 = vunpack.c.0.s8 %v882
        %v884 = vlaneseq
        %v885 = vshrl.u32 %v884, 7
        %v886 = vsub.s32 %v883, %v885
        %v887 = vrot.slane %v879, %v886
        %v889 = vunpack.c.l.s4 1934713408
        %v890 = vunpack.c.0.s8 %v889
        %v891 = vlaneseq
        %v892 = vshrl.u32 %v891, 7
        %v893 = vsub.s32 %v890, %v892
        %v894 = vrot.slane %v880, %v893
        %v895 = vcombine.low %v839, %v871
        %v896 = vcombine.high %v839, %v871
        %v897 = vcombine.low %v846, %v878
        %v898 = vcombine.high %v846, %v878
        %v899 = vcombine.low %v855, %v887
        %v900 = vcombine.high %v855, %v887
        %v901 = vcombine.low %v862, %v894
        %v902 = vcombine.high %v862, %v894
        %903 = vxpose.xlu0.b32.start [1/16] %v759, 128
        %904 = vxpose.xlu0.b32.cont [2/16] 0.0, 128
        %905 = vxpose.xlu0.b32.cont [3/16] 0.0, 128
        %906 = vxpose.xlu0.b32.cont [4/16] 0.0, 128
        %907 = vxpose.xlu0.b32.cont [5/16] 0.0, 128
        %908 = vxpose.xlu0.b32.cont [6/16] 0.0, 128
        %909 = vxpose.xlu0.b32.cont [7/16] 0.0, 128
        %910 = vxpose.xlu0.b32.cont [8/16] 0.0, 128
        %911 = vxpose.xlu0.b32.cont [9/16] 0.0, 128
        %912 = vxpose.xlu0.b32.cont [10/16] 0.0, 128
        %913 = vxpose.xlu0.b32.cont [11/16] 0.0, 128
        %914 = vxpose.xlu0.b32.cont [12/16] 0.0, 128
        %915 = vxpose.xlu0.b32.cont [13/16] 0.0, 128
        %916 = vxpose.xlu0.b32.cont [14/16] 0.0, 128
        %917 = vxpose.xlu0.b32.cont [15/16] 0.0, 128
        %918 = vxpose.xlu0.b32.end [16/16] 0.0, 128
        %v919 = vpop.trf.xlu0
        %v920 = vpop.trf.xlu0
        %v921 = vpop.trf.xlu0
        %v922 = vpop.trf.xlu0
        %v923 = vpop.trf.xlu0
        %v924 = vpop.trf.xlu0
        %v925 = vpop.trf.xlu0
        %v926 = vpop.trf.xlu0
        %v927 = vpop.trf.xlu0
        %v928 = vpop.trf.xlu0
        %v929 = vpop.trf.xlu0
        %v930 = vpop.trf.xlu0
        %v931 = vpop.trf.xlu0
        %v932 = vpop.trf.xlu0
        %v933 = vpop.trf.xlu0
        %v934 = vpop.trf.xlu0
        %935 = vxpose.xlu0.b32.start [1/16] %v760, 128
        %936 = vxpose.xlu0.b32.cont [2/16] 0.0, 128
        %937 = vxpose.xlu0.b32.cont [3/16] 0.0, 128
        %938 = vxpose.xlu0.b32.cont [4/16] 0.0, 128
        %939 = vxpose.xlu0.b32.cont [5/16] 0.0, 128
        %940 = vxpose.xlu0.b32.cont [6/16] 0.0, 128
        %941 = vxpose.xlu0.b32.cont [7/16] 0.0, 128
        %942 = vxpose.xlu0.b32.cont [8/16] 0.0, 128
        %943 = vxpose.xlu0.b32.cont [9/16] 0.0, 128
        %944 = vxpose.xlu0.b32.cont [10/16] 0.0, 128
        %945 = vxpose.xlu0.b32.cont [11/16] 0.0, 128
        %946 = vxpose.xlu0.b32.cont [12/16] 0.0, 128
        %947 = vxpose.xlu0.b32.cont [13/16] 0.0, 128
        %948 = vxpose.xlu0.b32.cont [14/16] 0.0, 128
        %949 = vxpose.xlu0.b32.cont [15/16] 0.0, 128
        %950 = vxpose.xlu0.b32.end [16/16] 0.0, 128
        %v951 = vpop.trf.xlu0
        %v952 = vpop.trf.xlu0
        %v953 = vpop.trf.xlu0
        %v954 = vpop.trf.xlu0
        %v955 = vpop.trf.xlu0
        %v956 = vpop.trf.xlu0
        %v957 = vpop.trf.xlu0
        %v958 = vpop.trf.xlu0
        %v959 = vpop.trf.xlu0
        %v960 = vpop.trf.xlu0
        %v961 = vpop.trf.xlu0
        %v962 = vpop.trf.xlu0
        %v963 = vpop.trf.xlu0
        %v964 = vpop.trf.xlu0
        %v965 = vpop.trf.xlu0
        %v966 = vpop.trf.xlu0
        %967 = vxpose.xlu0.b32.start [1/16] %v761, 128
        %968 = vxpose.xlu0.b32.cont [2/16] 0.0, 128
        %969 = vxpose.xlu0.b32.cont [3/16] 0.0, 128
        %970 = vxpose.xlu0.b32.cont [4/16] 0.0, 128
        %971 = vxpose.xlu0.b32.cont [5/16] 0.0, 128
        %972 = vxpose.xlu0.b32.cont [6/16] 0.0, 128
        %973 = vxpose.xlu0.b32.cont [7/16] 0.0, 128
        %974 = vxpose.xlu0.b32.cont [8/16] 0.0, 128
        %975 = vxpose.xlu0.b32.cont [9/16] 0.0, 128
        %976 = vxpose.xlu0.b32.cont [10/16] 0.0, 128
        %977 = vxpose.xlu0.b32.cont [11/16] 0.0, 128
        %978 = vxpose.xlu0.b32.cont [12/16] 0.0, 128
        %979 = vxpose.xlu0.b32.cont [13/16] 0.0, 128
        %980 = vxpose.xlu0.b32.cont [14/16] 0.0, 128
        %981 = vxpose.xlu0.b32.cont [15/16] 0.0, 128
        %982 = vxpose.xlu0.b32.end [16/16] 0.0, 128
        %v983 = vpop.trf.xlu0
        %v984 = vpop.trf.xlu0
        %v985 = vpop.trf.xlu0
        %v986 = vpop.trf.xlu0
        %v987 = vpop.trf.xlu0
        %v988 = vpop.trf.xlu0
        %v989 = vpop.trf.xlu0
        %v990 = vpop.trf.xlu0
        %v991 = vpop.trf.xlu0
        %v992 = vpop.trf.xlu0
        %v993 = vpop.trf.xlu0
        %v994 = vpop.trf.xlu0
        %v995 = vpop.trf.xlu0
        %v996 = vpop.trf.xlu0
        %v997 = vpop.trf.xlu0
        %v998 = vpop.trf.xlu0
        %999 = vxpose.xlu0.b32.start [1/16] %v762, 128
        %1000 = vxpose.xlu0.b32.cont [2/16] 0.0, 128
        %1001 = vxpose.xlu0.b32.cont [3/16] 0.0, 128
        %1002 = vxpose.xlu0.b32.cont [4/16] 0.0, 128
        %1003 = vxpose.xlu0.b32.cont [5/16] 0.0, 128
        %1004 = vxpose.xlu0.b32.cont [6/16] 0.0, 128
        %1005 = vxpose.xlu0.b32.cont [7/16] 0.0, 128
        %1006 = vxpose.xlu0.b32.cont [8/16] 0.0, 128
        %1007 = vxpose.xlu0.b32.cont [9/16] 0.0, 128
        %1008 = vxpose.xlu0.b32.cont [10/16] 0.0, 128
        %1009 = vxpose.xlu0.b32.cont [11/16] 0.0, 128
        %1010 = vxpose.xlu0.b32.cont [12/16] 0.0, 128
        %1011 = vxpose.xlu0.b32.cont [13/16] 0.0, 128
        %1012 = vxpose.xlu0.b32.cont [14/16] 0.0, 128
        %1013 = vxpose.xlu0.b32.cont [15/16] 0.0, 128
        %1014 = vxpose.xlu0.b32.end [16/16] 0.0, 128
        %v1015 = vpop.trf.xlu0
        %v1016 = vpop.trf.xlu0
        %v1017 = vpop.trf.xlu0
        %v1018 = vpop.trf.xlu0
        %v1019 = vpop.trf.xlu0
        %v1020 = vpop.trf.xlu0
        %v1021 = vpop.trf.xlu0
        %v1022 = vpop.trf.xlu0
        %v1023 = vpop.trf.xlu0
        %v1024 = vpop.trf.xlu0
        %v1025 = vpop.trf.xlu0
        %v1026 = vpop.trf.xlu0
        %v1027 = vpop.trf.xlu0
        %v1028 = vpop.trf.xlu0
        %v1029 = vpop.trf.xlu0
        %v1030 = vpop.trf.xlu0
        %1031 = vxpose.xlu0.b32.start [1/16] %v763, 128
        %1032 = vxpose.xlu0.b32.cont [2/16] 0.0, 128
        %1033 = vxpose.xlu0.b32.cont [3/16] 0.0, 128
        %1034 = vxpose.xlu0.b32.cont [4/16] 0.0, 128
        %1035 = vxpose.xlu0.b32.cont [5/16] 0.0, 128
        %1036 = vxpose.xlu0.b32.cont [6/16] 0.0, 128
        %1037 = vxpose.xlu0.b32.cont [7/16] 0.0, 128
        %1038 = vxpose.xlu0.b32.cont [8/16] 0.0, 128
        %1039 = vxpose.xlu0.b32.cont [9/16] 0.0, 128
        %1040 = vxpose.xlu0.b32.cont [10/16] 0.0, 128
        %1041 = vxpose.xlu0.b32.cont [11/16] 0.0, 128
        %1042 = vxpose.xlu0.b32.cont [12/16] 0.0, 128
        %1043 = vxpose.xlu0.b32.cont [13/16] 0.0, 128
        %1044 = vxpose.xlu0.b32.cont [14/16] 0.0, 128
        %1045 = vxpose.xlu0.b32.cont [15/16] 0.0, 128
        %1046 = vxpose.xlu0.b32.end [16/16] 0.0, 128
        %v1047 = vpop.trf.xlu0
        %v1048 = vpop.trf.xlu0
        %v1049 = vpop.trf.xlu0
        %v1050 = vpop.trf.xlu0
        %v1051 = vpop.trf.xlu0
        %v1052 = vpop.trf.xlu0
        %v1053 = vpop.trf.xlu0
        %v1054 = vpop.trf.xlu0
        %v1055 = vpop.trf.xlu0
        %v1056 = vpop.trf.xlu0
        %v1057 = vpop.trf.xlu0
        %v1058 = vpop.trf.xlu0
        %v1059 = vpop.trf.xlu0
        %v1060 = vpop.trf.xlu0
        %v1061 = vpop.trf.xlu0
        %v1062 = vpop.trf.xlu0
        %1063 = vxpose.xlu0.b32.start [1/16] %v764, 128
        %1064 = vxpose.xlu0.b32.cont [2/16] 0.0, 128
        %1065 = vxpose.xlu0.b32.cont [3/16] 0.0, 128
        %1066 = vxpose.xlu0.b32.cont [4/16] 0.0, 128
        %1067 = vxpose.xlu0.b32.cont [5/16] 0.0, 128
        %1068 = vxpose.xlu0.b32.cont [6/16] 0.0, 128
        %1069 = vxpose.xlu0.b32.cont [7/16] 0.0, 128
        %1070 = vxpose.xlu0.b32.cont [8/16] 0.0, 128
        %1071 = vxpose.xlu0.b32.cont [9/16] 0.0, 128
        %1072 = vxpose.xlu0.b32.cont [10/16] 0.0, 128
        %1073 = vxpose.xlu0.b32.cont [11/16] 0.0, 128
        %1074 = vxpose.xlu0.b32.cont [12/16] 0.0, 128
        %1075 = vxpose.xlu0.b32.cont [13/16] 0.0, 128
        %1076 = vxpose.xlu0.b32.cont [14/16] 0.0, 128
        %1077 = vxpose.xlu0.b32.cont [15/16] 0.0, 128
        %1078 = vxpose.xlu0.b32.end [16/16] 0.0, 128
        %v1079 = vpop.trf.xlu0
        %v1080 = vpop.trf.xlu0
        %v1081 = vpop.trf.xlu0
        %v1082 = vpop.trf.xlu0
        %v1083 = vpop.trf.xlu0
        %v1084 = vpop.trf.xlu0
        %v1085 = vpop.trf.xlu0
        %v1086 = vpop.trf.xlu0
        %v1087 = vpop.trf.xlu0
        %v1088 = vpop.trf.xlu0
        %v1089 = vpop.trf.xlu0
        %v1090 = vpop.trf.xlu0
        %v1091 = vpop.trf.xlu0
        %v1092 = vpop.trf.xlu0
        %v1093 = vpop.trf.xlu0
        %v1094 = vpop.trf.xlu0
        %1095 = vxpose.xlu0.b32.start [1/16] %v765, 128
        %1096 = vxpose.xlu0.b32.cont [2/16] 0.0, 128
        %1097 = vxpose.xlu0.b32.cont [3/16] 0.0, 128
        %1098 = vxpose.xlu0.b32.cont [4/16] 0.0, 128
        %1099 = vxpose.xlu0.b32.cont [5/16] 0.0, 128
        %1100 = vxpose.xlu0.b32.cont [6/16] 0.0, 128
        %1101 = vxpose.xlu0.b32.cont [7/16] 0.0, 128
        %1102 = vxpose.xlu0.b32.cont [8/16] 0.0, 128
        %1103 = vxpose.xlu0.b32.cont [9/16] 0.0, 128
        %1104 = vxpose.xlu0.b32.cont [10/16] 0.0, 128
        %1105 = vxpose.xlu0.b32.cont [11/16] 0.0, 128
        %1106 = vxpose.xlu0.b32.cont [12/16] 0.0, 128
        %1107 = vxpose.xlu0.b32.cont [13/16] 0.0, 128
        %1108 = vxpose.xlu0.b32.cont [14/16] 0.0, 128
        %1109 = vxpose.xlu0.b32.cont [15/16] 0.0, 128
        %1110 = vxpose.xlu0.b32.end [16/16] 0.0, 128
        %v1111 = vpop.trf.xlu0
        %v1112 = vpop.trf.xlu0
        %v1113 = vpop.trf.xlu0
        %v1114 = vpop.trf.xlu0
        %v1115 = vpop.trf.xlu0
        %v1116 = vpop.trf.xlu0
        %v1117 = vpop.trf.xlu0
        %v1118 = vpop.trf.xlu0
        %v1119 = vpop.trf.xlu0
        %v1120 = vpop.trf.xlu0
        %v1121 = vpop.trf.xlu0
        %v1122 = vpop.trf.xlu0
        %v1123 = vpop.trf.xlu0
        %v1124 = vpop.trf.xlu0
        %v1125 = vpop.trf.xlu0
        %v1126 = vpop.trf.xlu0
        %1127 = vxpose.xlu0.b32.start [1/16] %v766, 128
        %1128 = vxpose.xlu0.b32.cont [2/16] 0.0, 128
        %1129 = vxpose.xlu0.b32.cont [3/16] 0.0, 128
        %1130 = vxpose.xlu0.b32.cont [4/16] 0.0, 128
        %1131 = vxpose.xlu0.b32.cont [5/16] 0.0, 128
        %1132 = vxpose.xlu0.b32.cont [6/16] 0.0, 128
        %1133 = vxpose.xlu0.b32.cont [7/16] 0.0, 128
        %1134 = vxpose.xlu0.b32.cont [8/16] 0.0, 128
        %1135 = vxpose.xlu0.b32.cont [9/16] 0.0, 128
        %1136 = vxpose.xlu0.b32.cont [10/16] 0.0, 128
        %1137 = vxpose.xlu0.b32.cont [11/16] 0.0, 128
        %1138 = vxpose.xlu0.b32.cont [12/16] 0.0, 128
        %1139 = vxpose.xlu0.b32.cont [13/16] 0.0, 128
        %1140 = vxpose.xlu0.b32.cont [14/16] 0.0, 128
        %1141 = vxpose.xlu0.b32.cont [15/16] 0.0, 128
        %1142 = vxpose.xlu0.b32.end [16/16] 0.0, 128
        %v1143 = vpop.trf.xlu0
        %v1144 = vpop.trf.xlu0
        %v1145 = vpop.trf.xlu0
        %v1146 = vpop.trf.xlu0
        %v1147 = vpop.trf.xlu0
        %v1148 = vpop.trf.xlu0
        %v1149 = vpop.trf.xlu0
        %v1150 = vpop.trf.xlu0
        %v1151 = vpop.trf.xlu0
        %v1152 = vpop.trf.xlu0
        %v1153 = vpop.trf.xlu0
        %v1154 = vpop.trf.xlu0
        %v1155 = vpop.trf.xlu0
        %v1156 = vpop.trf.xlu0
        %v1157 = vpop.trf.xlu0
        %v1158 = vpop.trf.xlu0
        %1159 = vxpose.xlu0.b32.start [1/16] %v895, 128
        %1160 = vxpose.xlu0.b32.cont [2/16] 0.0, 128
        %1161 = vxpose.xlu0.b32.cont [3/16] 0.0, 128
        %1162 = vxpose.xlu0.b32.cont [4/16] 0.0, 128
        %1163 = vxpose.xlu0.b32.cont [5/16] 0.0, 128
        %1164 = vxpose.xlu0.b32.cont [6/16] 0.0, 128
        %1165 = vxpose.xlu0.b32.cont [7/16] 0.0, 128
        %1166 = vxpose.xlu0.b32.cont [8/16] 0.0, 128
        %1167 = vxpose.xlu0.b32.cont [9/16] 0.0, 128
        %1168 = vxpose.xlu0.b32.cont [10/16] 0.0, 128
        %1169 = vxpose.xlu0.b32.cont [11/16] 0.0, 128
        %1170 = vxpose.xlu0.b32.cont [12/16] 0.0, 128
        %1171 = vxpose.xlu0.b32.cont [13/16] 0.0, 128
        %1172 = vxpose.xlu0.b32.cont [14/16] 0.0, 128
        %1173 = vxpose.xlu0.b32.cont [15/16] 0.0, 128
        %1174 = vxpose.xlu0.b32.end [16/16] 0.0, 128
        %v1175 = vpop.trf.xlu0
        %v1176 = vpop.trf.xlu0
        %v1177 = vpop.trf.xlu0
        %v1178 = vpop.trf.xlu0
        %v1179 = vpop.trf.xlu0
        %v1180 = vpop.trf.xlu0
        %v1181 = vpop.trf.xlu0
        %v1182 = vpop.trf.xlu0
        %v1183 = vpop.trf.xlu0
        %v1184 = vpop.trf.xlu0
        %v1185 = vpop.trf.xlu0
        %v1186 = vpop.trf.xlu0
        %v1187 = vpop.trf.xlu0
        %v1188 = vpop.trf.xlu0
        %v1189 = vpop.trf.xlu0
        %v1190 = vpop.trf.xlu0
        %1191 = vxpose.xlu0.b32.start [1/16] %v896, 128
        %1192 = vxpose.xlu0.b32.cont [2/16] 0.0, 128
        %1193 = vxpose.xlu0.b32.cont [3/16] 0.0, 128
        %1194 = vxpose.xlu0.b32.cont [4/16] 0.0, 128
        %1195 = vxpose.xlu0.b32.cont [5/16] 0.0, 128
        %1196 = vxpose.xlu0.b32.cont [6/16] 0.0, 128
        %1197 = vxpose.xlu0.b32.cont [7/16] 0.0, 128
        %1198 = vxpose.xlu0.b32.cont [8/16] 0.0, 128
        %1199 = vxpose.xlu0.b32.cont [9/16] 0.0, 128
        %1200 = vxpose.xlu0.b32.cont [10/16] 0.0, 128
        %1201 = vxpose.xlu0.b32.cont [11/16] 0.0, 128
        %1202 = vxpose.xlu0.b32.cont [12/16] 0.0, 128
        %1203 = vxpose.xlu0.b32.cont [13/16] 0.0, 128
        %1204 = vxpose.xlu0.b32.cont [14/16] 0.0, 128
        %1205 = vxpose.xlu0.b32.cont [15/16] 0.0, 128
        %1206 = vxpose.xlu0.b32.end [16/16] 0.0, 128
        %v1207 = vpop.trf.xlu0
        %v1208 = vpop.trf.xlu0
        %v1209 = vpop.trf.xlu0
        %v1210 = vpop.trf.xlu0
        %v1211 = vpop.trf.xlu0
        %v1212 = vpop.trf.xlu0
        %v1213 = vpop.trf.xlu0
        %v1214 = vpop.trf.xlu0
        %v1215 = vpop.trf.xlu0
        %v1216 = vpop.trf.xlu0
        %v1217 = vpop.trf.xlu0
        %v1218 = vpop.trf.xlu0
        %v1219 = vpop.trf.xlu0
        %v1220 = vpop.trf.xlu0
        %v1221 = vpop.trf.xlu0
        %v1222 = vpop.trf.xlu0
        %1223 = vxpose.xlu0.b32.start [1/16] %v897, 128
        %1224 = vxpose.xlu0.b32.cont [2/16] 0.0, 128
        %1225 = vxpose.xlu0.b32.cont [3/16] 0.0, 128
        %1226 = vxpose.xlu0.b32.cont [4/16] 0.0, 128
        %1227 = vxpose.xlu0.b32.cont [5/16] 0.0, 128
        %1228 = vxpose.xlu0.b32.cont [6/16] 0.0, 128
        %1229 = vxpose.xlu0.b32.cont [7/16] 0.0, 128
        %1230 = vxpose.xlu0.b32.cont [8/16] 0.0, 128
        %1231 = vxpose.xlu0.b32.cont [9/16] 0.0, 128
        %1232 = vxpose.xlu0.b32.cont [10/16] 0.0, 128
        %1233 = vxpose.xlu0.b32.cont [11/16] 0.0, 128
        %1234 = vxpose.xlu0.b32.cont [12/16] 0.0, 128
        %1235 = vxpose.xlu0.b32.cont [13/16] 0.0, 128
        %1236 = vxpose.xlu0.b32.cont [14/16] 0.0, 128
        %1237 = vxpose.xlu0.b32.cont [15/16] 0.0, 128
        %1238 = vxpose.xlu0.b32.end [16/16] 0.0, 128
        %v1239 = vpop.trf.xlu0
        %v1240 = vpop.trf.xlu0
        %v1241 = vpop.trf.xlu0
        %v1242 = vpop.trf.xlu0
        %v1243 = vpop.trf.xlu0
        %v1244 = vpop.trf.xlu0
        %v1245 = vpop.trf.xlu0
        %v1246 = vpop.trf.xlu0
        %v1247 = vpop.trf.xlu0
        %v1248 = vpop.trf.xlu0
        %v1249 = vpop.trf.xlu0
        %v1250 = vpop.trf.xlu0
        %v1251 = vpop.trf.xlu0
        %v1252 = vpop.trf.xlu0
        %v1253 = vpop.trf.xlu0
        %v1254 = vpop.trf.xlu0
        %1255 = vxpose.xlu0.b32.start [1/16] %v898, 128
        %1256 = vxpose.xlu0.b32.cont [2/16] 0.0, 128
        %1257 = vxpose.xlu0.b32.cont [3/16] 0.0, 128
        %1258 = vxpose.xlu0.b32.cont [4/16] 0.0, 128
        %1259 = vxpose.xlu0.b32.cont [5/16] 0.0, 128
        %1260 = vxpose.xlu0.b32.cont [6/16] 0.0, 128
        %1261 = vxpose.xlu0.b32.cont [7/16] 0.0, 128
        %1262 = vxpose.xlu0.b32.cont [8/16] 0.0, 128
        %1263 = vxpose.xlu0.b32.cont [9/16] 0.0, 128
        %1264 = vxpose.xlu0.b32.cont [10/16] 0.0, 128
        %1265 = vxpose.xlu0.b32.cont [11/16] 0.0, 128
        %1266 = vxpose.xlu0.b32.cont [12/16] 0.0, 128
        %1267 = vxpose.xlu0.b32.cont [13/16] 0.0, 128
        %1268 = vxpose.xlu0.b32.cont [14/16] 0.0, 128
        %1269 = vxpose.xlu0.b32.cont [15/16] 0.0, 128
        %1270 = vxpose.xlu0.b32.end [16/16] 0.0, 128
        %v1271 = vpop.trf.xlu0
        %v1272 = vpop.trf.xlu0
        %v1273 = vpop.trf.xlu0
        %v1274 = vpop.trf.xlu0
        %v1275 = vpop.trf.xlu0
        %v1276 = vpop.trf.xlu0
        %v1277 = vpop.trf.xlu0
        %v1278 = vpop.trf.xlu0
        %v1279 = vpop.trf.xlu0
        %v1280 = vpop.trf.xlu0
        %v1281 = vpop.trf.xlu0
        %v1282 = vpop.trf.xlu0
        %v1283 = vpop.trf.xlu0
        %v1284 = vpop.trf.xlu0
        %v1285 = vpop.trf.xlu0
        %v1286 = vpop.trf.xlu0
        %1287 = vxpose.xlu0.b32.start [1/16] %v899, 128
        %1288 = vxpose.xlu0.b32.cont [2/16] 0.0, 128
        %1289 = vxpose.xlu0.b32.cont [3/16] 0.0, 128
        %1290 = vxpose.xlu0.b32.cont [4/16] 0.0, 128
        %1291 = vxpose.xlu0.b32.cont [5/16] 0.0, 128
        %1292 = vxpose.xlu0.b32.cont [6/16] 0.0, 128
        %1293 = vxpose.xlu0.b32.cont [7/16] 0.0, 128
        %1294 = vxpose.xlu0.b32.cont [8/16] 0.0, 128
        %1295 = vxpose.xlu0.b32.cont [9/16] 0.0, 128
        %1296 = vxpose.xlu0.b32.cont [10/16] 0.0, 128
        %1297 = vxpose.xlu0.b32.cont [11/16] 0.0, 128
        %1298 = vxpose.xlu0.b32.cont [12/16] 0.0, 128
        %1299 = vxpose.xlu0.b32.cont [13/16] 0.0, 128
        %1300 = vxpose.xlu0.b32.cont [14/16] 0.0, 128
        %1301 = vxpose.xlu0.b32.cont [15/16] 0.0, 128
        %1302 = vxpose.xlu0.b32.end [16/16] 0.0, 128
        %v1303 = vpop.trf.xlu0
        %v1304 = vpop.trf.xlu0
        %v1305 = vpop.trf.xlu0
        %v1306 = vpop.trf.xlu0
        %v1307 = vpop.trf.xlu0
        %v1308 = vpop.trf.xlu0
        %v1309 = vpop.trf.xlu0
        %v1310 = vpop.trf.xlu0
        %v1311 = vpop.trf.xlu0
        %v1312 = vpop.trf.xlu0
        %v1313 = vpop.trf.xlu0
        %v1314 = vpop.trf.xlu0
        %v1315 = vpop.trf.xlu0
        %v1316 = vpop.trf.xlu0
        %v1317 = vpop.trf.xlu0
        %v1318 = vpop.trf.xlu0
        %1319 = vxpose.xlu0.b32.start [1/16] %v900, 128
        %1320 = vxpose.xlu0.b32.cont [2/16] 0.0, 128
        %1321 = vxpose.xlu0.b32.cont [3/16] 0.0, 128
        %1322 = vxpose.xlu0.b32.cont [4/16] 0.0, 128
        %1323 = vxpose.xlu0.b32.cont [5/16] 0.0, 128
        %1324 = vxpose.xlu0.b32.cont [6/16] 0.0, 128
        %1325 = vxpose.xlu0.b32.cont [7/16] 0.0, 128
        %1326 = vxpose.xlu0.b32.cont [8/16] 0.0, 128
        %1327 = vxpose.xlu0.b32.cont [9/16] 0.0, 128
        %1328 = vxpose.xlu0.b32.cont [10/16] 0.0, 128
        %1329 = vxpose.xlu0.b32.cont [11/16] 0.0, 128
        %1330 = vxpose.xlu0.b32.cont [12/16] 0.0, 128
        %1331 = vxpose.xlu0.b32.cont [13/16] 0.0, 128
        %1332 = vxpose.xlu0.b32.cont [14/16] 0.0, 128
        %1333 = vxpose.xlu0.b32.cont [15/16] 0.0, 128
        %1334 = vxpose.xlu0.b32.end [16/16] 0.0, 128
        %v1335 = vpop.trf.xlu0
        %v1336 = vpop.trf.xlu0
        %v1337 = vpop.trf.xlu0
        %v1338 = vpop.trf.xlu0
        %v1339 = vpop.trf.xlu0
        %v1340 = vpop.trf.xlu0
        %v1341 = vpop.trf.xlu0
        %v1342 = vpop.trf.xlu0
        %v1343 = vpop.trf.xlu0
        %v1344 = vpop.trf.xlu0
        %v1345 = vpop.trf.xlu0
        %v1346 = vpop.trf.xlu0
        %v1347 = vpop.trf.xlu0
        %v1348 = vpop.trf.xlu0
        %v1349 = vpop.trf.xlu0
        %v1350 = vpop.trf.xlu0
        %1351 = vxpose.xlu0.b32.start [1/16] %v901, 128
        %1352 = vxpose.xlu0.b32.cont [2/16] 0.0, 128
        %1353 = vxpose.xlu0.b32.cont [3/16] 0.0, 128
        %1354 = vxpose.xlu0.b32.cont [4/16] 0.0, 128
        %1355 = vxpose.xlu0.b32.cont [5/16] 0.0, 128
        %1356 = vxpose.xlu0.b32.cont [6/16] 0.0, 128
        %1357 = vxpose.xlu0.b32.cont [7/16] 0.0, 128
        %1358 = vxpose.xlu0.b32.cont [8/16] 0.0, 128
        %1359 = vxpose.xlu0.b32.cont [9/16] 0.0, 128
        %1360 = vxpose.xlu0.b32.cont [10/16] 0.0, 128
        %1361 = vxpose.xlu0.b32.cont [11/16] 0.0, 128
        %1362 = vxpose.xlu0.b32.cont [12/16] 0.0, 128
        %1363 = vxpose.xlu0.b32.cont [13/16] 0.0, 128
        %1364 = vxpose.xlu0.b32.cont [14/16] 0.0, 128
        %1365 = vxpose.xlu0.b32.cont [15/16] 0.0, 128
        %1366 = vxpose.xlu0.b32.end [16/16] 0.0, 128
        %v1367 = vpop.trf.xlu0
        %v1368 = vpop.trf.xlu0
        %v1369 = vpop.trf.xlu0
        %v1370 = vpop.trf.xlu0
        %v1371 = vpop.trf.xlu0
        %v1372 = vpop.trf.xlu0
        %v1373 = vpop.trf.xlu0
        %v1374 = vpop.trf.xlu0
        %v1375 = vpop.trf.xlu0
        %v1376 = vpop.trf.xlu0
        %v1377 = vpop.trf.xlu0
        %v1378 = vpop.trf.xlu0
        %v1379 = vpop.trf.xlu0
        %v1380 = vpop.trf.xlu0
        %v1381 = vpop.trf.xlu0
        %v1382 = vpop.trf.xlu0
        %1383 = vxpose.xlu0.b32.start [1/16] %v902, 128
        %1384 = vxpose.xlu0.b32.cont [2/16] 0.0, 128
        %1385 = vxpose.xlu0.b32.cont [3/16] 0.0, 128
        %1386 = vxpose.xlu0.b32.cont [4/16] 0.0, 128
        %1387 = vxpose.xlu0.b32.cont [5/16] 0.0, 128
        %1388 = vxpose.xlu0.b32.cont [6/16] 0.0, 128
        %1389 = vxpose.xlu0.b32.cont [7/16] 0.0, 128
        %1390 = vxpose.xlu0.b32.cont [8/16] 0.0, 128
        %1391 = vxpose.xlu0.b32.cont [9/16] 0.0, 128
        %1392 = vxpose.xlu0.b32.cont [10/16] 0.0, 128
        %1393 = vxpose.xlu0.b32.cont [11/16] 0.0, 128
        %1394 = vxpose.xlu0.b32.cont [12/16] 0.0, 128
        %1395 = vxpose.xlu0.b32.cont [13/16] 0.0, 128
        %1396 = vxpose.xlu0.b32.cont [14/16] 0.0, 128
        %1397 = vxpose.xlu0.b32.cont [15/16] 0.0, 128
        %1398 = vxpose.xlu0.b32.end [16/16] 0.0, 128
        %v1399 = vpop.trf.xlu0
        %v1400 = vpop.trf.xlu0
        %v1401 = vpop.trf.xlu0
        %v1402 = vpop.trf.xlu0
        %v1403 = vpop.trf.xlu0
        %v1404 = vpop.trf.xlu0
        %v1405 = vpop.trf.xlu0
        %v1406 = vpop.trf.xlu0
        %v1407 = vpop.trf.xlu0
        %v1408 = vpop.trf.xlu0
        %v1409 = vpop.trf.xlu0
        %v1410 = vpop.trf.xlu0
        %v1411 = vpop.trf.xlu0
        %v1412 = vpop.trf.xlu0
        %v1413 = vpop.trf.xlu0
        %v1414 = vpop.trf.xlu0
        %v1415 = vcombine.low %v919, %v983
        %v1417 = vunpack.c.l.s4 1983009808
        %v1418 = vunpack.c.0.s8 %v1417
        %v1419 = vlaneseq
        %v1420 = vshrl.u32 %v1419, 7
        %v1421 = vsub.s32 %v1418, %v1420
        %v1422 = vrot.slane %v1415, %v1421
        %v1423 = vcombine.low %v951, %v1015
        %v1425 = vunpack.c.l.s4 1983009808
        %v1426 = vunpack.c.0.s8 %v1425
        %v1427 = vlaneseq
        %v1428 = vshrl.u32 %v1427, 7
        %v1429 = vsub.s32 %v1426, %v1428
        %v1430 = vrot.slane %v1423, %v1429
        %v1431 = vcombine.low %v1047, %v1111
        %v1433 = vunpack.c.l.s4 1983009808
        %v1434 = vunpack.c.0.s8 %v1433
        %v1435 = vlaneseq
        %v1436 = vshrl.u32 %v1435, 7
        %v1437 = vsub.s32 %v1434, %v1436
        %v1438 = vrot.slane %v1431, %v1437
        %v1439 = vcombine.low %v1079, %v1143
        %v1441 = vunpack.c.l.s4 1983009808
        %v1442 = vunpack.c.0.s8 %v1441
        %v1443 = vlaneseq
        %v1444 = vshrl.u32 %v1443, 7
        %v1445 = vsub.s32 %v1442, %v1444
        %v1446 = vrot.slane %v1439, %v1445
        %v1447 = vcombine.low %v1422, %v1430
        %v1449 = vunpack.c.l.s4 1934713408
        %v1450 = vunpack.c.0.s8 %v1449
        %v1451 = vlaneseq
        %v1452 = vshrl.u32 %v1451, 7
        %v1453 = vsub.s32 %v1450, %v1452
        %v1454 = vrot.slane %v1447, %v1453
        %v1455 = vcombine.low %v1438, %v1446
        %v1457 = vunpack.c.l.s4 1934713408
        %v1458 = vunpack.c.0.s8 %v1457
        %v1459 = vlaneseq
        %v1460 = vshrl.u32 %v1459, 7
        %v1461 = vsub.s32 %v1458, %v1460
        %v1462 = vrot.slane %v1455, %v1461
        %v1463 = vcombine.low %v1454, %v1462
        %v1464 = vcombine.high %v1454, %v1462
        %v1465 = vcombine.low %v1175, %v1239
        %v1467 = vunpack.c.l.s4 1983009808
        %v1468 = vunpack.c.0.s8 %v1467
        %v1469 = vlaneseq
        %v1470 = vshrl.u32 %v1469, 7
        %v1471 = vsub.s32 %v1468, %v1470
        %v1472 = vrot.slane %v1465, %v1471
        %v1473 = vcombine.low %v1207, %v1271
        %v1475 = vunpack.c.l.s4 1983009808
        %v1476 = vunpack.c.0.s8 %v1475
        %v1477 = vlaneseq
        %v1478 = vshrl.u32 %v1477, 7
        %v1479 = vsub.s32 %v1476, %v1478
        %v1480 = vrot.slane %v1473, %v1479
        %v1481 = vcombine.low %v1303, %v1367
        %v1483 = vunpack.c.l.s4 1983009808
        %v1484 = vunpack.c.0.s8 %v1483
        %v1485 = vlaneseq
        %v1486 = vshrl.u32 %v1485, 7
        %v1487 = vsub.s32 %v1484, %v1486
        %v1488 = vrot.slane %v1481, %v1487
        %v1489 = vcombine.low %v1335, %v1399
        %v1491 = vunpack.c.l.s4 1983009808
        %v1492 = vunpack.c.0.s8 %v1491
        %v1493 = vlaneseq
        %v1494 = vshrl.u32 %v1493, 7
        %v1495 = vsub.s32 %v1492, %v1494
        %v1496 = vrot.slane %v1489, %v1495
        %v1497 = vcombine.low %v1472, %v1480
        %v1499 = vunpack.c.l.s4 1934713408
        %v1500 = vunpack.c.0.s8 %v1499
        %v1501 = vlaneseq
        %v1502 = vshrl.u32 %v1501, 7
        %v1503 = vsub.s32 %v1500, %v1502
        %v1504 = vrot.slane %v1497, %v1503
        %v1505 = vcombine.low %v1488, %v1496
        %v1507 = vunpack.c.l.s4 1934713408
        %v1508 = vunpack.c.0.s8 %v1507
        %v1509 = vlaneseq
        %v1510 = vshrl.u32 %v1509, 7
        %v1511 = vsub.s32 %v1508, %v1510
        %v1512 = vrot.slane %v1505, %v1511
        %v1513 = vcombine.low %v1504, %v1512
        %v1514 = vcombine.high %v1504, %v1512
        %v1515 = vcombine.low %v363, %v365
        %v1517 = vunpack.c.l.s4 1983009808
        %v1518 = vunpack.c.0.s8 %v1517
        %v1519 = vlaneseq
        %v1520 = vshrl.u32 %v1519, 7
        %v1521 = vsub.s32 %v1518, %v1520
        %v1522 = vrot.slane %v1515, %v1521
        %v1523 = vcombine.low %v364, %v366
        %v1525 = vunpack.c.l.s4 1983009808
        %v1526 = vunpack.c.0.s8 %v1525
        %v1527 = vlaneseq
        %v1528 = vshrl.u32 %v1527, 7
        %v1529 = vsub.s32 %v1526, %v1528
        %v1530 = vrot.slane %v1523, %v1529
        %v1531 = vcombine.low %v367, %v369
        %v1533 = vunpack.c.l.s4 1983009808
        %v1534 = vunpack.c.0.s8 %v1533
        %v1535 = vlaneseq
        %v1536 = vshrl.u32 %v1535, 7
        %v1537 = vsub.s32 %v1534, %v1536
        %v1538 = vrot.slane %v1531, %v1537
        %v1539 = vcombine.low %v368, %v370
        %v1541 = vunpack.c.l.s4 1983009808
        %v1542 = vunpack.c.0.s8 %v1541
        %v1543 = vlaneseq
        %v1544 = vshrl.u32 %v1543, 7
        %v1545 = vsub.s32 %v1542, %v1544
        %v1546 = vrot.slane %v1539, %v1545
        %v1547 = vcombine.low %v1522, %v1530
        %v1549 = vunpack.c.l.s4 1934713408
        %v1550 = vunpack.c.0.s8 %v1549
        %v1551 = vlaneseq
        %v1552 = vshrl.u32 %v1551, 7
        %v1553 = vsub.s32 %v1550, %v1552
        %v1554 = vrot.slane %v1547, %v1553
        %v1555 = vcombine.low %v1538, %v1546
        %v1557 = vunpack.c.l.s4 1934713408
        %v1558 = vunpack.c.0.s8 %v1557
        %v1559 = vlaneseq
        %v1560 = vshrl.u32 %v1559, 7
        %v1561 = vsub.s32 %v1558, %v1560
        %v1562 = vrot.slane %v1555, %v1561
        %v1563 = vcombine.low %v1554, %v1562
        %v1564 = vcombine.high %v1554, %v1562
        %vm1565 = vcmask 64512
        %v1567 = vsel %vm1565, %v1463, 0
        %v1570 = vsel %vm1565, %v1513, 0
        %1572 = vmatprep.subr.mxu0 0.0
        %1573 = vmatpush1.msra.mxu0 0.0
        %1574 = vmatprep.subr.mxu0 0.0
        %1575 = vmatpush1.msra.mxu0 0.0
        %1576 = vmatprep.subr.mxu0 0.0
        %1577 = vmatpush1.msra.mxu0 0.0
        %1578 = vmatprep.subr.mxu0 0.0
        %1579 = vmatpush1.msra.mxu0 0.0
        %1580 = vmatprep.subr.mxu0 0.0
        %1581 = vmatpush1.msra.mxu0 0.0
        %1582 = vmatprep.subr.mxu0 0.0
        %1583 = vmatpush1.msra.mxu0 0.0
        %1584 = vmatprep.subr.mxu0 0.0
        %1585 = vmatpush1.msra.mxu0 0.0
        %1586 = vmatprep.subr.mxu0 0.0
        %1587 = vmatpush1.msra.mxu0 0.0
        %1588 = vmatprep.subr.mxu0 0.0
        %1589 = vmatpush1.msra.mxu0 0.0
        %1590 = vmatprep.subr.mxu0 0.0
        %1591 = vmatpush1.msra.mxu0 0.0
        %1592 = vmatprep.subr.mxu0 0.0
        %1593 = vmatpush1.msra.mxu0 0.0
        %1594 = vmatprep.subr.mxu0 0.0
        %1595 = vmatpush1.msra.mxu0 0.0
        %1596 = vmatprep.subr.mxu0 0.0
        %1597 = vmatpush1.msra.mxu0 0.0
        %1598 = vmatprep.subr.mxu0 0.0
        %1599 = vmatpush1.msra.mxu0 0.0
        %1600 = vmatprep.subr.mxu0 0.0
        %1601 = vmatpush1.msra.mxu0 0.0
        %1602 = vmatprep.subr.mxu0 0.0
        %1603 = vmatpush1.msra.mxu0 %v1563
        %1604 = vmatprep.subr.mxu0 0.0
        %1605 = vmatpush2.msra.mxu0 0.0
        %1606 = vmatprep.subr.mxu0 0.0
        %1607 = vmatpush2.msra.mxu0 0.0
        %1608 = vmatprep.subr.mxu0 0.0
        %1609 = vmatpush2.msra.mxu0 0.0
        %1610 = vmatprep.subr.mxu0 0.0
        %1611 = vmatpush2.msra.mxu0 0.0
        %1612 = vmatprep.subr.mxu0 0.0
        %1613 = vmatpush2.msra.mxu0 0.0
        %1614 = vmatprep.subr.mxu0 0.0
        %1615 = vmatpush2.msra.mxu0 0.0
        %1616 = vmatprep.subr.mxu0 0.0
        %1617 = vmatpush2.msra.mxu0 0.0
        %1618 = vmatprep.subr.mxu0 0.0
        %1619 = vmatpush2.msra.mxu0 0.0
        %1620 = vmatprep.subr.mxu0 0.0
        %1621 = vmatpush2.msra.mxu0 0.0
        %1622 = vmatprep.subr.mxu0 0.0
        %1623 = vmatpush2.msra.mxu0 0.0
        %1624 = vmatprep.subr.mxu0 0.0
        %1625 = vmatpush2.msra.mxu0 0.0
        %1626 = vmatprep.subr.mxu0 0.0
        %1627 = vmatpush2.msra.mxu0 0.0
        %1628 = vmatprep.subr.mxu0 0.0
        %1629 = vmatpush2.msra.mxu0 0.0
        %1630 = vmatprep.subr.mxu0 0.0
        %1631 = vmatpush2.msra.mxu0 0.0
        %1632 = vmatprep.subr.mxu0 0.0
        %1633 = vmatpush2.msra.mxu0 0.0
        %1634 = vmatprep.subr.mxu0 0.0
        %1635 = vmatpush2.msra.mxu0 0.0
        %1636 = vmatprep.mubr.f32.mxu0 0.0
        %1637 = vmatmul.mubr.f32.gmra.mxu0 %v1567
        %v1638 = vpop.f32.mrf.mxu0
        %v1639 = vadd.f32 0.0, %v1638
        %v1640 = vpop.f32.mrf.mxu0
        %1641 = vmatprep.mubr.f32.mxu0 0.0
        %1642 = vmatmul.mubr.f32.gmra.mxu0 %v1570
        %v1643 = vpop.f32.mrf.mxu0
        %v1644 = vadd.f32 0.0, %v1643
        %v1645 = vpop.f32.mrf.mxu0
        %1646 = vdwg.mxu0
        %v1648 = vsel %vm1565, %v1464, 0
        %v1651 = vsel %vm1565, %v1514, 0
        %1653 = vmatprep.subr.mxu0 0.0
        %1654 = vmatpush1.msra.mxu0 0.0
        %1655 = vmatprep.subr.mxu0 0.0
        %1656 = vmatpush1.msra.mxu0 0.0
        %1657 = vmatprep.subr.mxu0 0.0
        %1658 = vmatpush1.msra.mxu0 0.0
        %1659 = vmatprep.subr.mxu0 0.0
        %1660 = vmatpush1.msra.mxu0 0.0
        %1661 = vmatprep.subr.mxu0 0.0
        %1662 = vmatpush1.msra.mxu0 0.0
        %1663 = vmatprep.subr.mxu0 0.0
        %1664 = vmatpush1.msra.mxu0 0.0
        %1665 = vmatprep.subr.mxu0 0.0
        %1666 = vmatpush1.msra.mxu0 0.0
        %1667 = vmatprep.subr.mxu0 0.0
        %1668 = vmatpush1.msra.mxu0 0.0
        %1669 = vmatprep.subr.mxu0 0.0
        %1670 = vmatpush1.msra.mxu0 0.0
        %1671 = vmatprep.subr.mxu0 0.0
        %1672 = vmatpush1.msra.mxu0 0.0
        %1673 = vmatprep.subr.mxu0 0.0
        %1674 = vmatpush1.msra.mxu0 0.0
        %1675 = vmatprep.subr.mxu0 0.0
        %1676 = vmatpush1.msra.mxu0 0.0
        %1677 = vmatprep.subr.mxu0 0.0
        %1678 = vmatpush1.msra.mxu0 0.0
        %1679 = vmatprep.subr.mxu0 0.0
        %1680 = vmatpush1.msra.mxu0 0.0
        %1681 = vmatprep.subr.mxu0 0.0
        %1682 = vmatpush1.msra.mxu0 0.0
        %1683 = vmatprep.subr.mxu0 0.0
        %1684 = vmatpush1.msra.mxu0 %v1564
        %1685 = vmatprep.subr.mxu0 0.0
        %1686 = vmatpush2.msra.mxu0 0.0
        %1687 = vmatprep.subr.mxu0 0.0
        %1688 = vmatpush2.msra.mxu0 0.0
        %1689 = vmatprep.subr.mxu0 0.0
        %1690 = vmatpush2.msra.mxu0 0.0
        %1691 = vmatprep.subr.mxu0 0.0
        %1692 = vmatpush2.msra.mxu0 0.0
        %1693 = vmatprep.subr.mxu0 0.0
        %1694 = vmatpush2.msra.mxu0 0.0
        %1695 = vmatprep.subr.mxu0 0.0
        %1696 = vmatpush2.msra.mxu0 0.0
        %1697 = vmatprep.subr.mxu0 0.0
        %1698 = vmatpush2.msra.mxu0 0.0
        %1699 = vmatprep.subr.mxu0 0.0
        %1700 = vmatpush2.msra.mxu0 0.0
        %1701 = vmatprep.subr.mxu0 0.0
        %1702 = vmatpush2.msra.mxu0 0.0
        %1703 = vmatprep.subr.mxu0 0.0
        %1704 = vmatpush2.msra.mxu0 0.0
        %1705 = vmatprep.subr.mxu0 0.0
        %1706 = vmatpush2.msra.mxu0 0.0
        %1707 = vmatprep.subr.mxu0 0.0
        %1708 = vmatpush2.msra.mxu0 0.0
        %1709 = vmatprep.subr.mxu0 0.0
        %1710 = vmatpush2.msra.mxu0 0.0
        %1711 = vmatprep.subr.mxu0 0.0
        %1712 = vmatpush2.msra.mxu0 0.0
        %1713 = vmatprep.subr.mxu0 0.0
        %1714 = vmatpush2.msra.mxu0 0.0
        %1715 = vmatprep.subr.mxu0 0.0
        %1716 = vmatpush2.msra.mxu0 0.0
        %1717 = vmatprep.mubr.f32.mxu0 0.0
        %1718 = vmatmul.mubr.f32.gmra.mxu0 %v1648
        %v1719 = vpop.f32.mrf.mxu0
        %v1720 = vadd.f32 0.0, %v1719
        %v1721 = vpop.f32.mrf.mxu0
        %1722 = vmatprep.mubr.f32.mxu0 0.0
        %1723 = vmatmul.mubr.f32.gmra.mxu0 %v1651
        %v1724 = vpop.f32.mrf.mxu0
        %v1725 = vadd.f32 0.0, %v1724
        %v1726 = vpop.f32.mrf.mxu0
        %1727 = vdwg.mxu0
        %v1728 = vadd.f32 %v371, %v1639
        %v1729 = vadd.f32 %v372, %v1644
        %v1730 = vadd.f32 %v373, %v1720
        %v1731 = vadd.f32 %v374, %v1725
        %vm1732 = vcmask 130048
        %1733 = vst.msk [vmem:[%s266] sm:$0xff] %vm1732, %v1728
        %1734 = vst.msk [vmem:[%s266 + $0x8] sm:$0xff] %vm1732, %v1729
        %1735 = vst.msk [vmem:[%s266 + $0x10] sm:$0xff] %vm1732, %v1730
        %1736 = vst.msk [vmem:[%s266 + $0x18] sm:$0xff] %vm1732, %v1731
        %v1737 = vld [vmem:[%s291] sm:$0xff]
        %v1738 = vld [vmem:[%s291 + $0x8] sm:$0xff]
        %v1739 = vld [vmem:[%s291 + $0x10] sm:$0xff]
        %v1740 = vld [vmem:[%s291 + $0x18] sm:$0xff]
        %v1741 = vcombine.low 1.0, 1.0
        %v1743 = vunpack.c.l.s4 1983009808
        %v1744 = vunpack.c.0.s8 %v1743
        %v1745 = vlaneseq
        %v1746 = vshrl.u32 %v1745, 7
        %v1747 = vsub.s32 %v1744, %v1746
        %v1748 = vrot.slane %v1741, %v1747
        %v1749 = vcombine.low %v1748, %v1748
        %v1751 = vunpack.c.l.s4 1934713408
        %v1752 = vunpack.c.0.s8 %v1751
        %v1753 = vlaneseq
        %v1754 = vshrl.u32 %v1753, 7
        %v1755 = vsub.s32 %v1752, %v1754
        %v1756 = vrot.slane %v1749, %v1755
        %v1757 = vcombine.low %v1756, %v1756
        %v1758 = vcombine.high %v1756, %v1756
        %1759 = vmatprep.subr.mxu0 0.0
        %1760 = vmatpush1.msra.mxu0 0.0
        %1761 = vmatprep.subr.mxu0 0.0
        %1762 = vmatpush1.msra.mxu0 0.0
        %1763 = vmatprep.subr.mxu0 0.0
        %1764 = vmatpush1.msra.mxu0 0.0
        %1765 = vmatprep.subr.mxu0 0.0
        %1766 = vmatpush1.msra.mxu0 0.0
        %1767 = vmatprep.subr.mxu0 0.0
        %1768 = vmatpush1.msra.mxu0 0.0
        %1769 = vmatprep.subr.mxu0 0.0
        %1770 = vmatpush1.msra.mxu0 0.0
        %1771 = vmatprep.subr.mxu0 0.0
        %1772 = vmatpush1.msra.mxu0 0.0
        %1773 = vmatprep.subr.mxu0 0.0
        %1774 = vmatpush1.msra.mxu0 0.0
        %1775 = vmatprep.subr.mxu0 0.0
        %1776 = vmatpush1.msra.mxu0 0.0
        %1777 = vmatprep.subr.mxu0 0.0
        %1778 = vmatpush1.msra.mxu0 0.0
        %1779 = vmatprep.subr.mxu0 0.0
        %1780 = vmatpush1.msra.mxu0 0.0
        %1781 = vmatprep.subr.mxu0 0.0
        %1782 = vmatpush1.msra.mxu0 0.0
        %1783 = vmatprep.subr.mxu0 0.0
        %1784 = vmatpush1.msra.mxu0 0.0
        %1785 = vmatprep.subr.mxu0 0.0
        %1786 = vmatpush1.msra.mxu0 0.0
        %1787 = vmatprep.subr.mxu0 0.0
        %1788 = vmatpush1.msra.mxu0 0.0
        %1789 = vmatprep.subr.mxu0 0.0
        %1790 = vmatpush1.msra.mxu0 %v1757
        %1791 = vmatprep.subr.mxu0 0.0
        %1792 = vmatpush2.msra.mxu0 0.0
        %1793 = vmatprep.subr.mxu0 0.0
        %1794 = vmatpush2.msra.mxu0 0.0
        %1795 = vmatprep.subr.mxu0 0.0
        %1796 = vmatpush2.msra.mxu0 0.0
        %1797 = vmatprep.subr.mxu0 0.0
        %1798 = vmatpush2.msra.mxu0 0.0
        %1799 = vmatprep.subr.mxu0 0.0
        %1800 = vmatpush2.msra.mxu0 0.0
        %1801 = vmatprep.subr.mxu0 0.0
        %1802 = vmatpush2.msra.mxu0 0.0
        %1803 = vmatprep.subr.mxu0 0.0
        %1804 = vmatpush2.msra.mxu0 0.0
        %1805 = vmatprep.subr.mxu0 0.0
        %1806 = vmatpush2.msra.mxu0 0.0
        %1807 = vmatprep.subr.mxu0 0.0
        %1808 = vmatpush2.msra.mxu0 0.0
        %1809 = vmatprep.subr.mxu0 0.0
        %1810 = vmatpush2.msra.mxu0 0.0
        %1811 = vmatprep.subr.mxu0 0.0
        %1812 = vmatpush2.msra.mxu0 0.0
        %1813 = vmatprep.subr.mxu0 0.0
        %1814 = vmatpush2.msra.mxu0 0.0
        %1815 = vmatprep.subr.mxu0 0.0
        %1816 = vmatpush2.msra.mxu0 0.0
        %1817 = vmatprep.subr.mxu0 0.0
        %1818 = vmatpush2.msra.mxu0 0.0
        %1819 = vmatprep.subr.mxu0 0.0
        %1820 = vmatpush2.msra.mxu0 0.0
        %1821 = vmatprep.subr.mxu0 0.0
        %1822 = vmatpush2.msra.mxu0 0.0
        %1823 = vmatprep.mubr.f32.mxu0 0.0
        %1824 = vmatmul.mubr.f32.gmra.mxu0 %v1567
        %v1825 = vpop.f32.mrf.mxu0
        %v1826 = vadd.f32 0.0, %v1825
        %v1827 = vpop.f32.mrf.mxu0
        %1828 = vmatprep.mubr.f32.mxu0 0.0
        %1829 = vmatmul.mubr.f32.gmra.mxu0 %v1570
        %v1830 = vpop.f32.mrf.mxu0
        %v1831 = vadd.f32 0.0, %v1830
        %v1832 = vpop.f32.mrf.mxu0
        %1833 = vdwg.mxu0
        %1834 = vmatprep.subr.mxu0 0.0
        %1835 = vmatpush1.msra.mxu0 0.0
        %1836 = vmatprep.subr.mxu0 0.0
        %1837 = vmatpush1.msra.mxu0 0.0
        %1838 = vmatprep.subr.mxu0 0.0
        %1839 = vmatpush1.msra.mxu0 0.0
        %1840 = vmatprep.subr.mxu0 0.0
        %1841 = vmatpush1.msra.mxu0 0.0
        %1842 = vmatprep.subr.mxu0 0.0
        %1843 = vmatpush1.msra.mxu0 0.0
        %1844 = vmatprep.subr.mxu0 0.0
        %1845 = vmatpush1.msra.mxu0 0.0
        %1846 = vmatprep.subr.mxu0 0.0
        %1847 = vmatpush1.msra.mxu0 0.0
        %1848 = vmatprep.subr.mxu0 0.0
        %1849 = vmatpush1.msra.mxu0 0.0
        %1850 = vmatprep.subr.mxu0 0.0
        %1851 = vmatpush1.msra.mxu0 0.0
        %1852 = vmatprep.subr.mxu0 0.0
        %1853 = vmatpush1.msra.mxu0 0.0
        %1854 = vmatprep.subr.mxu0 0.0
        %1855 = vmatpush1.msra.mxu0 0.0
        %1856 = vmatprep.subr.mxu0 0.0
        %1857 = vmatpush1.msra.mxu0 0.0
        %1858 = vmatprep.subr.mxu0 0.0
        %1859 = vmatpush1.msra.mxu0 0.0
        %1860 = vmatprep.subr.mxu0 0.0
        %1861 = vmatpush1.msra.mxu0 0.0
        %1862 = vmatprep.subr.mxu0 0.0
        %1863 = vmatpush1.msra.mxu0 0.0
        %1864 = vmatprep.subr.mxu0 0.0
        %1865 = vmatpush1.msra.mxu0 %v1758
        %1866 = vmatprep.subr.mxu0 0.0
        %1867 = vmatpush2.msra.mxu0 0.0
        %1868 = vmatprep.subr.mxu0 0.0
        %1869 = vmatpush2.msra.mxu0 0.0
        %1870 = vmatprep.subr.mxu0 0.0
        %1871 = vmatpush2.msra.mxu0 0.0
        %1872 = vmatprep.subr.mxu0 0.0
        %1873 = vmatpush2.msra.mxu0 0.0
        %1874 = vmatprep.subr.mxu0 0.0
        %1875 = vmatpush2.msra.mxu0 0.0
        %1876 = vmatprep.subr.mxu0 0.0
        %1877 = vmatpush2.msra.mxu0 0.0
        %1878 = vmatprep.subr.mxu0 0.0
        %1879 = vmatpush2.msra.mxu0 0.0
        %1880 = vmatprep.subr.mxu0 0.0
        %1881 = vmatpush2.msra.mxu0 0.0
        %1882 = vmatprep.subr.mxu0 0.0
        %1883 = vmatpush2.msra.mxu0 0.0
        %1884 = vmatprep.subr.mxu0 0.0
        %1885 = vmatpush2.msra.mxu0 0.0
        %1886 = vmatprep.subr.mxu0 0.0
        %1887 = vmatpush2.msra.mxu0 0.0
        %1888 = vmatprep.subr.mxu0 0.0
        %1889 = vmatpush2.msra.mxu0 0.0
        %1890 = vmatprep.subr.mxu0 0.0
        %1891 = vmatpush2.msra.mxu0 0.0
        %1892 = vmatprep.subr.mxu0 0.0
        %1893 = vmatpush2.msra.mxu0 0.0
        %1894 = vmatprep.subr.mxu0 0.0
        %1895 = vmatpush2.msra.mxu0 0.0
        %1896 = vmatprep.subr.mxu0 0.0
        %1897 = vmatpush2.msra.mxu0 0.0
        %1898 = vmatprep.mubr.f32.mxu0 0.0
        %1899 = vmatmul.mubr.f32.gmra.mxu0 %v1648
        %v1900 = vpop.f32.mrf.mxu0
        %v1901 = vadd.f32 0.0, %v1900
        %v1902 = vpop.f32.mrf.mxu0
        %1903 = vmatprep.mubr.f32.mxu0 0.0
        %1904 = vmatmul.mubr.f32.gmra.mxu0 %v1651
        %v1905 = vpop.f32.mrf.mxu0
        %v1906 = vadd.f32 0.0, %v1905
        %v1907 = vpop.f32.mrf.mxu0
        %1908 = vdwg.mxu0
        %v1909 = vadd.f32 %v1737, %v1826
        %v1910 = vadd.f32 %v1738, %v1831
        %v1911 = vadd.f32 %v1739, %v1901
        %v1912 = vadd.f32 %v1740, %v1906
        %vm1913 = vcmask 7168
        %1914 = vst.msk [vmem:[%s291] sm:$0xff] %vm1913, %v1909
        %1915 = vst.msk [vmem:[%s291 + $0x8] sm:$0xff] %vm1913, %v1910
        %1916 = vst.msk [vmem:[%s291 + $0x10] sm:$0xff] %vm1913, %v1911
        %1917 = vst.msk [vmem:[%s291 + $0x18] sm:$0xff] %vm1913, %v1912
        %s1918 = sand.u32 %s113, 1
        %s1919 = scalar_lea.sflag [#allocation4], %s1918
        %s1920 = sand.u32 %s113, 1
        %s1921 = smul.addr %s1920, 32
        %s1922 = scalar_lea.vmem [#allocation7], %s1921
        %s1923 = smul.u32 2, %s30
        %p1924 = scmp.lt.s32.totalorder %s29, 1
        %s1925 = scalar_select %p1924, %s29, 1
        %p1926 = scmp.lt.s32.totalorder %s1923, 1
        %s1927 = scalar_select %p1926, %s1923, 1
        %s1928 = smul.addr %s1927, 2
        %s1929 = smul.addr %s1925, 4
        %s1930 = sadd.s32 %s1928, %s1929
        %s1931 = smul.addr %s1930, 8
        %s1932 = scalar_lea.vmem %s3, %s1931
        // Predicated region
        $region41: #{tpu_custom_call.1} parent=27 // pred_check
          %p1933 = pneg %p123
        $region42: #{tpu_custom_call.1} parent=27 // pred_check_branch
          %1935 = sbr.rel (%p1933) target = $region44
        $region43: #{tpu_custom_call.1} parent=27 // pred_region
          %s1936 = smul.u32 2, %s30
          %s1938 = ssub.s32 512, 512
          %1939 = vsyncadd %s1919, %s1938
          %s1940 = smul.addr %s1936, 2
          %s1941 = smul.addr %s29, 4
          %s1942 = sadd.s32 %s1940, %s1941
          %s1943 = smul.addr %s1942, 128
          %s1944 = scalar_lea.hbm %s2, %s1943
          %s1945 = sshll.u32 %s1922, 4
          %s1946 = int_to_ptr.vmem [resolvable:$true] %s1945
          %1951 = dma.vmem_to_hbm [thread:$0]  %s1946, 512, %s1944, %s1919, 128, 128, 8
        $region44: #{tpu_custom_call.1} parent=27 // pred_fallthru
          _
        // Predicated region
        $region45: #{tpu_custom_call.1} parent=27 // pred_check
          %p1952 = pneg %p151
        $region46: #{tpu_custom_call.1} parent=27 // pred_check_branch
          %1954 = sbr.rel (%p1952) target = $region48
        $region47: #{tpu_custom_call.1} parent=27 // pred_region
          %s1955 = smul.u32 2, %s30
        $region48: #{tpu_custom_call.1} parent=27 // pred_fallthru
          _
      $region28: #{tpu_custom_call.1} parent=5 // pred_fallthru
        _
      %p1956 = scmp.le.s32.totalorder 2, %s19
      // Predicated region
      $region49: #{tpu_custom_call.1} parent=5 // pred_check
        %p1957 = pneg %p1956
      $region50: #{tpu_custom_call.1} parent=5 // pred_check_branch
        %1959 = sbr.rel (%p1957) target = $region52
      $region51: #{tpu_custom_call.1} parent=5 // pred_region
        %s1960 = ssub.s32 %s19, 2
        // Predicated region
        $region53: #{tpu_custom_call.1} parent=51 // pred_check
          %p1961 = pneg %p129
        $region54: #{tpu_custom_call.1} parent=51 // pred_check_branch
          %1963 = sbr.rel (%p1961) target = $region56
        $region55: #{tpu_custom_call.1} parent=51 // pred_region
          %s1964 = sand.u32 %s114, 1
          %s1965 = scalar_lea.sflag [#allocation4], %s1964
          %s1966 = sand.u32 %s114, 1
          %s1967 = smul.addr %s1966, 32
          %s1968 = scalar_lea.vmem [#allocation7], %s1967
          %1969 = dma.done %s1965, 512
        $region56: #{tpu_custom_call.1} parent=51 // pred_fallthru
          _
        // Predicated region
        $region57: #{tpu_custom_call.1} parent=51 // pred_check
          %p1970 = pneg %p157
        $region58: #{tpu_custom_call.1} parent=51 // pred_check_branch
          %1972 = sbr.rel (%p1970) target = $region60
        $region59: #{tpu_custom_call.1} parent=51 // pred_region
          %s1973 = smul.u32 2, %s33
          %p1974 = scmp.lt.s32.totalorder %s32, 1
          %s1975 = scalar_select %p1974, %s32, 1
          %p1976 = scmp.lt.s32.totalorder %s1973, 1
          %s1977 = scalar_select %p1976, %s1973, 1
          %s1978 = smul.addr %s1977, 2
          %s1979 = smul.addr %s1975, 4
          %s1980 = sadd.s32 %s1978, %s1979
          %s1981 = smul.addr %s1980, 8
          %s1982 = scalar_lea.vmem %s3, %s1981
        $region60: #{tpu_custom_call.1} parent=51 // pred_fallthru
          _
      $region52: #{tpu_custom_call.1} parent=5 // pred_fallthru
        _
    $region6: #{tpu_custom_call.1} parent=1 // loop_footer
      %s23 = sadd.s32 1, %s19
    $region7: #{tpu_custom_call.1} parent=1 // loop_footer_branch
      %18 = sbr.rel target = $region3
    $region8: #{tpu_custom_call.1} parent=1 // loop_exit
      _
    %1983 = vsyncpa [#allocation3], 1
    %s1984 = scalar_lea.sflag [#allocation3], 1
    %1985 = vsyncpa %s1984, 1
    %1986 = vsyncpa [#allocation6], 1
    %s1987 = scalar_lea.sflag [#allocation6], 1
    %1988 = vsyncpa %s1987, 1
    %1989 = vsyncpa [#allocation4], 1
    %s1990 = scalar_lea.sflag [#allocation4], 1
    %1991 = vsyncpa %s1990, 1

</llo_original>
